<compile_context>
chip_gen: v6e
topology: v6e:2x2x1
jax: 0.10.0
libtpu: 0.0.40
codegen_flags: <defaults>
</compile_context>

<pallas_src>
import functools

import jax
import jax.numpy as jnp
import numpy as np
from jax.experimental import pallas as pl
from jax.experimental.pallas import tpu as pltpu

MOVE_VOCAB_SIZE = 5 * 64 * 64  # 20480


def _policy_kernel(h_ref, wpol_ref, bpol_ref, mask_ref, logits_ref):
    """Hot path: one vocab tile of the policy projection + legal-move masking.

    h_ref    : [Bp, D]  bf16 (resident across vocab tiles; block index constant)
    wpol_ref : [D, T]   bf16 (streamed tile; fed straight to the MXU)
    bpol_ref : [1, T]   f32
    mask_ref : [Bp, T]  int8 (nonzero = legal)
    """
    logits = (jnp.dot(h_ref[...], wpol_ref[...],
                      preferred_element_type=jnp.float32)
              + bpol_ref[...])
    # masked_fill(~legal_mask, -inf)
    logits_ref[...] = jnp.where(mask_ref[...] != 0, logits, -jnp.inf)


def _round_up(x, m):
    return ((x + m - 1) // m) * m


# Candidate tiles: divisors of 20480 that are multiples of 128, largest first.
# Capped at 5120 so the grid keeps >= 4 steps (needed for a future per-TC split
# on v7x and to keep the pipeline warm).
_TILE_CANDIDATES = (5120, 4096, 2560, 2048, 1280, 1024, 640, 512, 256, 128)


def _pick_vocab_tile(D, Bp, vmem_budget_bytes):
    """Largest vocab tile whose double-buffered working set fits the budget."""
    for tile in _TILE_CANDIDATES:
        if MOVE_VOCAB_SIZE % tile:
            continue
        w_bytes = 2 * D * tile * 2        # bf16 W_policy, double-buffered
        logit_bytes = 2 * Bp * tile * 4   # f32 logits, double-buffered
        mask_bytes = 2 * Bp * tile * 1    # int8 mask, double-buffered
        bias_bytes = 2 * tile * 4         # f32 bias, double-buffered
        h_bytes = 2 * Bp * D * 2          # resident bf16 h (conservative: x2)
        if w_bytes + logit_bytes + mask_bytes + bias_bytes + h_bytes <= vmem_budget_bytes:
            return tile
    return 128


@functools.partial(jax.jit,
                   static_argnames=("vocab_tile", "vmem_limit_bytes", "w_buffers"))
def policy_value_ponder_head(latent, params, legal_mask, *,
                             vocab_tile=None, vmem_limit_bytes=None, w_buffers=2):
    """latent: [B, D] f32; legal_mask: [B, V] bool/int (nonzero = legal).

    Returns (logits [B, V] f32, value [B] f32, ponder [B] f32).

    vocab_tile      : policy-vocab tile per grid step. Default: auto-sized from a
                      conservative scoped-VMEM budget (safe on v5e's 16 MiB default
                      and v7x's 64 MiB physical / 32 MiB scoped VMEM).
    vmem_limit_bytes: forwarded to the Mosaic compiler; also raises the tile-sizing
                      budget when set (e.g. 64 << 20 on v6e for very large D).
    w_buffers       : buffer count for the W_policy stream (3 can help on v5e if
                      profiling shows exposed DMA; 2 is fine on v6e/v7x).
    """
    B, D = latent.shape
    V = MOVE_VOCAB_SIZE

    (wfc, bfc, wpol, bpol, wval, bval, wpond, bpond) = params
    # W_policy should already be stored in bf16 (see init_params); this is a
    # no-op then, and a defensive cast otherwise.
    wpol = wpol.astype(jnp.bfloat16)

    # ---- fc / value / ponder heads: plain XLA ops (trivial FLOPs) ------------
    # A separate single-step pallas_call cost as much as the whole policy kernel
    # at small D; XLA also overlaps this with the start of W_policy streaming.
    h = jax.nn.relu(latent @ wfc + bfc)                      # [B, D] f32
    value = (h @ wval + bval)[:, 0]                          # [B]
    ponder = (h @ wpond + bpond)[:, 0]                       # [B]

    # ---- batch blocking -------------------------------------------------------
    # B < 8: keep the true batch as the block (block == full array dim is legal);
    #        masked sublane stores on a tiny tile cost negligible VPU work and we
    #        avoid 4x wasted logits/mask HBM traffic.
    # B >= 8: pad to the f32 sublane granularity so every tile/store is dense.
    Bp = _round_up(B, 8) if B >= 8 else B

    h_bf16 = h.astype(jnp.bfloat16)                          # bf16 feed to the MXU
    mask_i8 = legal_mask.astype(jnp.int8)                    # 4x less HBM than int32
    if Bp != B:
        h_bf16 = jnp.pad(h_bf16, ((0, Bp - B), (0, 0)))
        mask_i8 = jnp.pad(mask_i8, ((0, Bp - B), (0, 0)))

    # ---- vocab tile sizing (VMEM-aware) --------------------------------------
    if vocab_tile is None:
        # Conservative: v5e's default scoped limit is 16 MiB; leave 2 MiB headroom.
        budget = (vmem_limit_bytes if vmem_limit_bytes is not None
                  else 16 * 1024 * 1024) - 2 * 1024 * 1024
        vocab_tile = _pick_vocab_tile(D, Bp, budget)
    assert V % vocab_tile == 0 and vocab_tile % 128 == 0

    w_spec = pl.BlockSpec((D, vocab_tile), lambda j: (0, j))
    if w_buffers > 2:
        # Deeper pipelining of the dominant HBM stream (v5e exposed-DMA case).
        w_spec = pl.BlockSpec((D, vocab_tile), lambda j: (0, j),
                              pipeline_mode=pl.Buffered(w_buffers))

    # ---- hot path: tiled policy projection over the 20480-wide vocab ---------
    # TODO(synk): on v7x, split the vocab axis explicitly across the 2 TensorCores
    # (pltpu.CORE_PARALLEL / pl.core_map) to use both per-TC HBM streams; plain
    # "parallel" is kept here for portability across v5e/v6e/v7x.
    logits = pl.pallas_call(
        _policy_kernel,
        out_shape=jax.ShapeDtypeStruct((Bp, V), jnp.float32),
        grid=(V // vocab_tile,),
        in_specs=[
            pl.BlockSpec((Bp, D), lambda j: (0, 0)),             # h (resident, bf16)
            w_spec,                                              # W_policy tile (bf16)
            pl.BlockSpec((1, vocab_tile), lambda j: (0, j)),     # b_policy tile (f32)
            pl.BlockSpec((Bp, vocab_tile), lambda j: (0, j)),    # legal_mask tile (i8)
        ],
        out_specs=pl.BlockSpec((Bp, vocab_tile), lambda j: (0, j)),
        compiler_params=pltpu.CompilerParams(
            dimension_semantics=("parallel",),
            vmem_limit_bytes=vmem_limit_bytes),
    )(h_bf16, wpol, bpol, mask_i8)

    return logits[:B], value, ponder


def init_params(key, latent_dim):
    """Deterministic synthetic parameter init (shapes match the nn.Linear layers).

    Weights are stored pre-transposed as [in_features, out_features] so every
    matmul is a plain x @ W + b.  W_policy is stored in bf16: it is the dominant
    HBM stream of the whole head.
    """
    ks = jax.random.split(key, 8)
    s = 1.0 / np.sqrt(latent_dim)
    wfc = jax.random.uniform(ks[0], (latent_dim, latent_dim), jnp.float32, -s, s)
    bfc = jax.random.uniform(ks[1], (1, latent_dim), jnp.float32, -s, s)
    wpol = jax.random.uniform(ks[2], (latent_dim, MOVE_VOCAB_SIZE),
                              jnp.float32, -s, s).astype(jnp.bfloat16)
    bpol = jax.random.uniform(ks[3], (1, MOVE_VOCAB_SIZE), jnp.float32, -s, s)
    wval = jax.random.uniform(ks[4], (latent_dim, 1), jnp.float32, -s, s)
    bval = jax.random.uniform(ks[5], (1, 1), jnp.float32, -s, s)
    wpond = jax.random.uniform(ks[6], (latent_dim, 1), jnp.float32, -s, s)
    bpond = jax.random.uniform(ks[7], (1, 1), jnp.float32, -s, s)
    return (wfc, bfc, wpol, bpol, wval, bval, wpond, bpond)


def reference_forward(latent, params, legal_mask):
    """Pure-JAX reference mirroring the kernel's bf16 W_policy / bf16-h matmul.

    NOTE: bf16 W_policy (and the bf16 MXU feed of h) is a deliberate deviation
    from the fp32 PyTorch module (~3 significant digits on the policy logits);
    value/ponder/fc stay fp32.
    """
    (wfc, bfc, wpol, bpol, wval, bval, wpond, bpond) = params
    h = jax.nn.relu(latent @ wfc + bfc)
    logits = jnp.dot(h.astype(jnp.bfloat16), wpol.astype(jnp.bfloat16),
                     preferred_element_type=jnp.float32) + bpol
    logits = jnp.where(legal_mask != 0, logits, -jnp.inf)
    value = (h @ wval + bval)[:, 0]
    ponder = (h @ wpond + bpond)[:, 0]
    return logits, value, ponder


if __name__ == "__main__":
    B, D = 2, 32
    key = jax.random.PRNGKey(0)
    k_lat, k_mask, k_par = jax.random.split(key, 3)

    latent = jax.random.normal(k_lat, (B, D), jnp.float32)
    # legal_mask: True = legal move, False = illegal (filled with -inf).
    legal_mask = jax.random.bernoulli(k_mask, 0.3, (B, MOVE_VOCAB_SIZE))
    params = init_params(k_par, D)

    logits, value, ponder = policy_value_ponder_head(latent, params, legal_mask)
    jax.block_until_ready((logits, value, ponder))

    ref_logits, ref_value, ref_ponder = reference_forward(latent, params, legal_mask)
    np.testing.assert_allclose(np.asarray(logits), np.asarray(ref_logits),
                               rtol=1e-4, atol=1e-4)
    np.testing.assert_allclose(np.asarray(value), np.asarray(ref_value),
                               rtol=1e-4, atol=1e-4)
    np.testing.assert_allclose(np.asarray(ponder), np.asarray(ref_ponder),
                               rtol=1e-4, atol=1e-4)

    # NOTE: rows whose legal_mask is all-zero yield all -inf logits (matches the
    # PyTorch reference); guard against NaN softmax at the call site if needed.
    print("KERNEL_OK")
</pallas_src>

<mosaic_0001>
module attributes {stable_mosaic.version = 11 : i64} {
  func.func @_policy_kernel(%arg0: i32, %arg1: memref<2x32xbf16, #tpu.memory_space<vmem>>, %arg2: memref<32x5120xbf16, #tpu.memory_space<vmem>>, %arg3: memref<1x5120xf32, #tpu.memory_space<vmem>>, %arg4: memref<2x5120xi8, #tpu.memory_space<vmem>>, %arg5: memref<2x5120xf32, #tpu.memory_space<vmem>>) attributes {dimension_semantics = [#tpu.dimension_semantics<parallel>], iteration_bounds = array<i64: 4>, scalar_prefetch = 0 : i64, scratch_operands = 0 : i64, tpu.core_type = #tpu.core_type<tc>, window_params = [{pipeline_mode = #tpu.pipeline_mode<synchronous>, transform_indices = @transform_0, window_bounds = array<i64: 2, 32>}, {transform_indices = @transform_1, window_bounds = array<i64: 32, 5120>}, {transform_indices = @transform_2, window_bounds = array<i64: 1, 5120>}, {transform_indices = @transform_3, window_bounds = array<i64: 2, 5120>}, {transform_indices = @transform_4, window_bounds = array<i64: 2, 5120>}]} {
    %c0 = arith.constant 0 : index
    %c0_0 = arith.constant 0 : index
    %0 = vector.load %arg1[%c0, %c0_0] : memref<2x32xbf16, #tpu.memory_space<vmem>>, vector<2x32xbf16>
    %c0_1 = arith.constant 0 : index
    %c0_2 = arith.constant 0 : index
    %1 = vector.load %arg2[%c0_1, %c0_2] : memref<32x5120xbf16, #tpu.memory_space<vmem>>, vector<32x5120xbf16>
    %cst = arith.constant dense<0.000000e+00> : vector<2x5120xf32>
    %2 = tpu.matmul %0, %1, %cst {dimension_numbers = #tpu.dot_dimension_numbers<[1], [0], [0], [1], [0, 0, 1, 1], [], []>} : vector<2x32xbf16>, vector<32x5120xbf16>, vector<2x5120xf32> -> vector<2x5120xf32>
    %c0_3 = arith.constant 0 : index
    %c0_4 = arith.constant 0 : index
    %3 = vector.load %arg3[%c0_3, %c0_4] : memref<1x5120xf32, #tpu.memory_space<vmem>>, vector<1x5120xf32>
    %4 = vector.broadcast %3 : vector<1x5120xf32> to vector<2x5120xf32>
    %5 = arith.addf %2, %4 : vector<2x5120xf32>
    %c0_5 = arith.constant 0 : index
    %c0_6 = arith.constant 0 : index
    %6 = vector.load %arg4[%c0_5, %c0_6] : memref<2x5120xi8, #tpu.memory_space<vmem>>, vector<2x5120xi8>
    %c0_i8 = arith.constant 0 : i8
    %7 = vector.broadcast %c0_i8 : i8 to vector<2x5120xi8>
    %8 = arith.cmpi ne, %6, %7 : vector<2x5120xi8>
    %cst_7 = arith.constant 0xFF800000 : f32
    %9 = vector.broadcast %cst_7 : f32 to vector<2x5120xf32>
    %10 = arith.select %8, %5, %9 : vector<2x5120xi1>, vector<2x5120xf32>
    %c0_8 = arith.constant 0 : index
    %c0_9 = arith.constant 0 : index
    %11 = vector.load %arg5[%c0_8, %c0_9] : memref<2x5120xf32, #tpu.memory_space<vmem>>, vector<2x5120xf32>
    tpu.vector_store %arg5[%c0_8, %c0_9], %10 {strides = array<i32>} : memref<2x5120xf32, #tpu.memory_space<vmem>>, vector<2x5120xf32>,
    return
  }
  func.func @transform_0(%arg0: i32) -> (i32, i32) {
    %c0_i32 = arith.constant 0 : i32
    %c0_i32_0 = arith.constant 0 : i32
    %c0_i32_1 = arith.constant 0 : i32
    return %c0_i32, %c0_i32_0 : i32, i32
  }
  func.func @transform_1(%arg0: i32) -> (i32, i32) {
    %c0_i32 = arith.constant 0 : i32
    %c0_i32_0 = arith.constant 0 : i32
    return %c0_i32, %arg0 : i32, i32
  }
  func.func @transform_2(%arg0: i32) -> (i32, i32) {
    %c0_i32 = arith.constant 0 : i32
    %c0_i32_0 = arith.constant 0 : i32
    return %c0_i32, %arg0 : i32, i32
  }
  func.func @transform_3(%arg0: i32) -> (i32, i32) {
    %c0_i32 = arith.constant 0 : i32
    %c0_i32_0 = arith.constant 0 : i32
    return %c0_i32, %arg0 : i32, i32
  }
  func.func @transform_4(%arg0: i32) -> (i32, i32) {
    %c0_i32 = arith.constant 0 : i32
    %c0_i32_0 = arith.constant 0 : i32
    return %c0_i32, %arg0 : i32, i32
  }
}

</mosaic_0001>

<llo_original>
// kernel: policy_value_ponder_head.1
$region0: #{policy_value_ponder_head.1}
  #allocation0 [shape = 'u32[]', space=smem, size = 0x4, offset = 0x4, fixed_abs, tag = 'smem constant byte address 0x4 - core index']
  #allocation1 [shape = 'u32[144,128]{1,0:T(1,128)}', space=vmem, size = 0x12000, scoped, tag = 'internal scratch']
  %s0 = inlined_call_operand.vmem [shape: bf16[2,32], index: 0, kind: input, shape index: {}]
  %s1 = inlined_call_operand.hbm [shape: bf16[32,20480], index: 1, kind: input, shape index: {}]
  %s2 = inlined_call_operand.hbm [shape: f32[1,20480], index: 2, kind: input, shape index: {}]
  %s3 = inlined_call_operand.vmem [shape: s8[2,20480], index: 3, kind: input, shape index: {}]
  %s4 = inlined_call_operand.hbm [shape: f32[2,20480], index: 4, kind: output, shape index: {}]
  %s5 = sld [smem:[#allocation0]]
  $region57: #{policy_value_ponder_head.1} parent=0
    _
  %s7 = ssub.s32 1, %s5
  %s8 = scalar_select 0, %s7, %s5
  $region1: #{policy_value_ponder_head.1} parent=0
    #allocation2 [shape = 'u8[655360]{0}', space=vmem, size = 0xa0000, scoped, tag = 'input window, operand 1']
    #allocation3 [shape = 's32[2]{0}', space=sflag, size = 0x8, scoped, tag = 'scoped memory for policy_value_ponder_head.1']
    #allocation4 [shape = 's32[2]{0}', space=sflag, size = 0x8, scoped, tag = 'scoped memory for policy_value_ponder_head.1']
    #allocation5 [shape = 'u8[40960]{0}', space=vmem, size = 0xa000, scoped, tag = 'input window, operand 2']
    #allocation6 [shape = 's32[2]{0}', space=sflag, size = 0x8, scoped, tag = 'scoped memory for policy_value_ponder_head.1']
    #allocation7 [shape = 'u8[81920]{0}', space=vmem, size = 0x14000, scoped, tag = 'output window, operand 0']
    %9 = vsyncpa [#allocation3], 0
    %s10 = scalar_lea.sflag [#allocation3], 1
    %11 = vsyncpa %s10, 0
    %12 = vsyncpa [#allocation6], 0
    %s13 = scalar_lea.sflag [#allocation6], 1
    %14 = vsyncpa %s13, 0
    %15 = vsyncpa [#allocation4], 0
    %s16 = scalar_lea.sflag [#allocation4], 1
    %17 = vsyncpa %s16, 0
    loop: start=0, step=1, limit=6
    $region2: #{policy_value_ponder_head.1} parent=1 // loop_pre_header
      _
    $region3: #{policy_value_ponder_head.1} parent=1 // loop_header
      %s19 = sphi 0, %s23
      %p20 = scmp.ge.s32.totalorder %s19, 6
      %s27 = sphi 0, %s27
      %s29 = sphi 0, %s27
      %s30 = sphi 0, %s29
      %s44 = sphi 0, %s30
      %s50 = sphi 0, %s52
      %s53 = sphi 0, %s50
      %s54 = sphi 0, %s53
      %s70 = sphi 0, %s54
      %s76 = sphi 0, %s78
      %s79 = sphi 0, %s76
      %s80 = sphi 0, %s79
      %s96 = sphi 0, %s80
      %s102 = sphi 0, %s104
      %s105 = sphi 0, %s102
      %s106 = sphi 0, %s105
      %s122 = sphi 0, %s106
      %s128 = sphi 0, %s130
      %s131 = sphi 0, %s128
      %s132 = sphi 0, %s131
      %s148 = sphi 0, %s132
    $region4: #{policy_value_ponder_head.1} parent=1 // loop_header_branch
      %22 = sbr.rel (%p20) target = $region8
    $region5: #{policy_value_ponder_head.1} parent=1 // loop_body
      %s24 = ssub.s32 %s19, 1
      %s25 = ssub.s32 %s19, 2
      %s26 = sadd.s32 %s19, 1
      %s28 = sadd.s32 %s27, 1
      %p31 = scmp.eq.s32.totalorder %s19, 3
      %p32 = scmp.ne.s32.totalorder %s27, %s29
      %p33 = scmp.eq.s32.totalorder %s19, 0
      %p34 = por %p32, %p33
      %p35 = scmp.ne.s32.totalorder %s27, %s29
      %p36 = scmp.eq.s32.totalorder %s24, 3
      %p37 = por %p35, %p36
      %p38 = scmp.ne.s32.totalorder %s29, %s30
      %p39 = scmp.eq.s32.totalorder %s24, 0
      %p40 = por %p38, %p39
      %p41 = scmp.ne.s32.totalorder %s29, %s30
      %p42 = scmp.eq.s32.totalorder %s25, 3
      %p43 = por %p41, %p42
      %p45 = scmp.ne.s32.totalorder %s30, %s44
      %p46 = scmp.eq.s32.totalorder %s25, 0
      %p47 = por %p45, %p46
      %s48 = ssub.s32 %s19, %s26
      %p49 = scmp.eq.s32.totalorder %s48, 0
      %s51 = sadd.s32 %s50, 1
      %s52 = scalar_select %p49, %s50, %s51
      %p55 = pneg %p49
      %p56 = scmp.eq.s32.totalorder %s19, 3
      %p57 = por %p55, %p56
      %p58 = scmp.ne.s32.totalorder %s50, %s53
      %p59 = scmp.eq.s32.totalorder %s19, 0
      %p60 = por %p58, %p59
      %p61 = scmp.ne.s32.totalorder %s50, %s53
      %p62 = scmp.eq.s32.totalorder %s24, 3
      %p63 = por %p61, %p62
      %p64 = scmp.ne.s32.totalorder %s53, %s54
      %p65 = scmp.eq.s32.totalorder %s24, 0
      %p66 = por %p64, %p65
      %p67 = scmp.ne.s32.totalorder %s53, %s54
      %p68 = scmp.eq.s32.totalorder %s25, 3
      %p69 = por %p67, %p68
      %p71 = scmp.ne.s32.totalorder %s54, %s70
      %p72 = scmp.eq.s32.totalorder %s25, 0
      %p73 = por %p71, %p72
      %s74 = ssub.s32 %s19, %s26
      %p75 = scmp.eq.s32.totalorder %s74, 0
      %s77 = sadd.s32 %s76, 1
      %s78 = scalar_select %p75, %s76, %s77
      %p81 = pneg %p75
      %p82 = scmp.eq.s32.totalorder %s19, 3
      %p83 = por %p81, %p82
      %p84 = scmp.ne.s32.totalorder %s76, %s79
      %p85 = scmp.eq.s32.totalorder %s19, 0
      %p86 = por %p84, %p85
      %p87 = scmp.ne.s32.totalorder %s76, %s79
      %p88 = scmp.eq.s32.totalorder %s24, 3
      %p89 = por %p87, %p88
      %p90 = scmp.ne.s32.totalorder %s79, %s80
      %p91 = scmp.eq.s32.totalorder %s24, 0
      %p92 = por %p90, %p91
      %p93 = scmp.ne.s32.totalorder %s79, %s80
      %p94 = scmp.eq.s32.totalorder %s25, 3
      %p95 = por %p93, %p94
      %p97 = scmp.ne.s32.totalorder %s80, %s96
      %p98 = scmp.eq.s32.totalorder %s25, 0
      %p99 = por %p97, %p98
      %s100 = ssub.s32 %s19, %s26
      %p101 = scmp.eq.s32.totalorder %s100, 0
      %s103 = sadd.s32 %s102, 1
      %s104 = scalar_select %p101, %s102, %s103
      %p107 = pneg %p101
      %p108 = scmp.eq.s32.totalorder %s19, 3
      %p109 = por %p107, %p108
      %p110 = scmp.ne.s32.totalorder %s102, %s105
      %p111 = scmp.eq.s32.totalorder %s19, 0
      %p112 = por %p110, %p111
      %p113 = scmp.ne.s32.totalorder %s102, %s105
      %p114 = scmp.eq.s32.totalorder %s24, 3
      %p115 = por %p113, %p114
      %p116 = scmp.ne.s32.totalorder %s105, %s106
      %p117 = scmp.eq.s32.totalorder %s24, 0
      %p118 = por %p116, %p117
      %p119 = scmp.ne.s32.totalorder %s105, %s106
      %p120 = scmp.eq.s32.totalorder %s25, 3
      %p121 = por %p119, %p120
      %p123 = scmp.ne.s32.totalorder %s106, %s122
      %p124 = scmp.eq.s32.totalorder %s25, 0
      %p125 = por %p123, %p124
      %s126 = ssub.s32 %s19, %s26
      %p127 = scmp.eq.s32.totalorder %s126, 0
      %s129 = sadd.s32 %s128, 1
      %s130 = scalar_select %p127, %s128, %s129
      %p133 = pneg %p127
      %p134 = scmp.eq.s32.totalorder %s19, 3
      %p135 = por %p133, %p134
      %p136 = scmp.ne.s32.totalorder %s128, %s131
      %p137 = scmp.eq.s32.totalorder %s19, 0
      %p138 = por %p136, %p137
      %p139 = scmp.ne.s32.totalorder %s128, %s131
      %p140 = scmp.eq.s32.totalorder %s24, 3
      %p141 = por %p139, %p140
      %p142 = scmp.ne.s32.totalorder %s131, %s132
      %p143 = scmp.eq.s32.totalorder %s24, 0
      %p144 = por %p142, %p143
      %p145 = scmp.ne.s32.totalorder %s131, %s132
      %p146 = scmp.eq.s32.totalorder %s25, 3
      %p147 = por %p145, %p146
      %p149 = scmp.ne.s32.totalorder %s132, %s148
      %p150 = scmp.eq.s32.totalorder %s25, 0
      %p151 = por %p149, %p150
      %p152 = scmp.le.s32.totalorder 1, %s19
      %p153 = scmp.lt.s32.totalorder %s19, 5
      %p154 = pnand %p152, %p153
      %p155 = pneg %p154
      // Predicated region
      $region9: #{policy_value_ponder_head.1} parent=5 // pred_check
        _
      $region10: #{policy_value_ponder_head.1} parent=5 // pred_check_branch
        %157 = sbr.rel (%p154) target = $region12
      $region11: #{policy_value_ponder_head.1} parent=5 // pred_region
        %s158 = ssub.s32 %s19, 1
        // Predicated region
        $region13: #{policy_value_ponder_head.1} parent=11 // pred_check
          %p159 = pneg %p40
        $region14: #{policy_value_ponder_head.1} parent=11 // pred_check_branch
          %161 = sbr.rel (%p159) target = $region16
        $region15: #{policy_value_ponder_head.1} parent=11 // pred_region
          _
        $region16: #{policy_value_ponder_head.1} parent=11 // pred_fallthru
          _
      $region12: #{policy_value_ponder_head.1} parent=5 // pred_fallthru
        _
      %p162 = scmp.lt.s32.totalorder %s19, 4
      // Predicated region
      $region17: #{policy_value_ponder_head.1} parent=5 // pred_check
        %p163 = pneg %p162
      $region18: #{policy_value_ponder_head.1} parent=5 // pred_check_branch
        %165 = sbr.rel (%p163) target = $region20
      $region19: #{policy_value_ponder_head.1} parent=5 // pred_region
        // Predicated region
        $region21: #{policy_value_ponder_head.1} parent=19 // pred_check
          %p166 = pneg %p60
        $region22: #{policy_value_ponder_head.1} parent=19 // pred_check_branch
          %168 = sbr.rel (%p166) target = $region24
        $region23: #{policy_value_ponder_head.1} parent=19 // pred_region
          %s169 = sand.u32 %s50, 1
          %s170 = scalar_lea.sflag [#allocation3], %s169
          %s171 = sand.u32 %s50, 1
          %s172 = smul.addr %s171, 640
          %s173 = scalar_lea.vmem [#allocation2], %s172
          %s174 = smul.u32 40, %s19
          %s176 = ssub.s32 10240, 10240
          %177 = vsyncadd %s170, %s176
          %s178 = smul.addr %s174, 64
          %s179 = scalar_lea.hbm %s1, %s178
          %s180 = sshll.u32 %s173, 4
          %s181 = int_to_ptr.vmem [resolvable:$true] %s180
          %186 = dma.hbm_to_vmem [thread:$0]  %s179, 10240, %s181, %s170, 10240, 2560, 160
        $region24: #{policy_value_ponder_head.1} parent=19 // pred_fallthru
          _
        // Predicated region
        $region25: #{policy_value_ponder_head.1} parent=19 // pred_check
          %p187 = pneg %p86
        $region26: #{policy_value_ponder_head.1} parent=19 // pred_check_branch
          %189 = sbr.rel (%p187) target = $region28
        $region27: #{policy_value_ponder_head.1} parent=19 // pred_region
          %s190 = sand.u32 %s76, 1
          %s191 = scalar_lea.sflag [#allocation6], %s190
          %s192 = sand.u32 %s76, 1
          %s193 = smul.addr %s192, 40
          %s194 = scalar_lea.vmem [#allocation5], %s193
          %s195 = smul.u32 40, %s19
          %s197 = ssub.s32 640, 640
          %198 = vsyncadd %s191, %s197
          %s199 = smul.addr %s195, 16
          %s200 = scalar_lea.hbm %s2, %s199
          %s202 = sshll.u32 %s194, 4
          %s203 = int_to_ptr.vmem [resolvable:$true] %s202
          %205 = dma.hbm_to_vmem [thread:$0]  %s200, 640, %s203, %s191
        $region28: #{policy_value_ponder_head.1} parent=19 // pred_fallthru
          _
        // Predicated region
        $region29: #{policy_value_ponder_head.1} parent=19 // pred_check
          %p206 = pneg %p112
        $region30: #{policy_value_ponder_head.1} parent=19 // pred_check_branch
          %208 = sbr.rel (%p206) target = $region32
        $region31: #{policy_value_ponder_head.1} parent=19 // pred_region
          %s209 = smul.u32 40, %s19
          %p210 = scmp.lt.s32.totalorder %s209, 159
          %s211 = scalar_select %p210, %s209, 159
          %s212 = scalar_lea.vmem %s3, %s211
          %s213 = smul.u32 40, %s19
        $region32: #{policy_value_ponder_head.1} parent=19 // pred_fallthru
          _
      $region20: #{policy_value_ponder_head.1} parent=5 // pred_fallthru
        _
      %p214 = scmp.le.s32.totalorder 1, %s19
      %p215 = scmp.lt.s32.totalorder %s19, 5
      %p216 = pnand %p214, %p215
      %p217 = pneg %p216
      // Predicated region
      $region33: #{policy_value_ponder_head.1} parent=5 // pred_check
        _
      $region34: #{policy_value_ponder_head.1} parent=5 // pred_check_branch
        %219 = sbr.rel (%p216) target = $region36
      $region35: #{policy_value_ponder_head.1} parent=5 // pred_region
        %s220 = ssub.s32 %s19, 1
        %s221 = sand.u32 %s53, 1
        %s222 = scalar_lea.sflag [#allocation3], %s221
        %s223 = sand.u32 %s53, 1
        %s224 = smul.addr %s223, 640
        %s225 = scalar_lea.vmem [#allocation2], %s224
        // Predicated region
        $region37: #{policy_value_ponder_head.1} parent=35 // pred_check
          %p226 = pneg %p66
        $region38: #{policy_value_ponder_head.1} parent=35 // pred_check_branch
          %228 = sbr.rel (%p226) target = $region40
        $region39: #{policy_value_ponder_head.1} parent=35 // pred_region
          %229 = dma.done %s222, 10240
        $region40: #{policy_value_ponder_head.1} parent=35 // pred_fallthru
          _
        %s230 = sand.u32 %s79, 1
        %s231 = scalar_lea.sflag [#allocation6], %s230
        %s232 = sand.u32 %s79, 1
        %s233 = smul.addr %s232, 40
        %s234 = scalar_lea.vmem [#allocation5], %s233
        // Predicated region
        $region41: #{policy_value_ponder_head.1} parent=35 // pred_check
          %p235 = pneg %p92
        $region42: #{policy_value_ponder_head.1} parent=35 // pred_check_branch
          %237 = sbr.rel (%p235) target = $region44
        $region43: #{policy_value_ponder_head.1} parent=35 // pred_region
          %238 = dma.done %s231, 640
        $region44: #{policy_value_ponder_head.1} parent=35 // pred_fallthru
          _
        %p239 = pneg %p40
        %p240 = pneg %p37
        %s241 = sand.u32 %s53, 1
        %s242 = scalar_lea.sflag [#allocation3], %s241
        %s243 = sand.u32 %s53, 1
        %s244 = smul.addr %s243, 640
        %s245 = scalar_lea.vmem [#allocation2], %s244
        %p246 = pneg %p66
        %p247 = pneg %p63
        %s248 = sand.u32 %s79, 1
        %s249 = scalar_lea.sflag [#allocation6], %s248
        %s250 = sand.u32 %s79, 1
        %s251 = smul.addr %s250, 40
        %s252 = scalar_lea.vmem [#allocation5], %s251
        %p253 = pneg %p92
        %p254 = pneg %p89
        %s255 = smul.u32 40, %s24
        %p256 = scmp.lt.s32.totalorder %s255, 159
        %s257 = scalar_select %p256, %s255, 159
        %s258 = scalar_lea.vmem %s3, %s257
        %p259 = pneg %p118
        %p260 = pneg %p115
        %p261 = pneg %p144
        %p262 = pneg %p141
        %s263 = sand.u32 %s131, 1
        %s264 = scalar_lea.sflag [#allocation4], %s263
        %s265 = sand.u32 %s131, 1
        %s266 = smul.addr %s265, 80
        %s267 = scalar_lea.vmem [#allocation7], %s266
        %s268 = smul.u32 40, %s24
        %s269 = smul.u32 40, %s24
        %s270 = smul.u32 40, %s24
        %p271 = scmp.lt.s32.totalorder %s270, 159
        %s272 = scalar_select %p271, %s270, 159
        %s273 = scalar_lea.vmem %s3, %s272
        %s274 = smul.u32 40, %s24
        %s275 = smul.u32 40, %s24
        %v279 = vld [vmem:[%s0] sm:$0x1]
        %v280 = vld [vmem:[%s225] sm:$0xff]
        %v281 = vld [vmem:[%s225 + $0x8] sm:$0xff]
        %v282 = vld [vmem:[%s225 + $0x10] sm:$0xff]
        %v283 = vld [vmem:[%s225 + $0x18] sm:$0xff]
        %v284 = vld [vmem:[%s225 + $0x20] sm:$0xff]
        %v285 = vld [vmem:[%s225 + $0x28] sm:$0xff]
        %v286 = vld [vmem:[%s225 + $0x30] sm:$0xff]
        %v287 = vld [vmem:[%s225 + $0x38] sm:$0xff]
        %v288 = vld [vmem:[%s225 + $0x40] sm:$0xff]
        %v289 = vld [vmem:[%s225 + $0x48] sm:$0xff]
        %v290 = vld [vmem:[%s225 + $0x50] sm:$0xff]
        %v291 = vld [vmem:[%s225 + $0x58] sm:$0xff]
        %v292 = vld [vmem:[%s225 + $0x60] sm:$0xff]
        %v293 = vld [vmem:[%s225 + $0x68] sm:$0xff]
        %v294 = vld [vmem:[%s225 + $0x70] sm:$0xff]
        %v295 = vld [vmem:[%s225 + $0x78] sm:$0xff]
        %v296 = vld [vmem:[%s225 + $0x80] sm:$0xff]
        %v297 = vld [vmem:[%s225 + $0x88] sm:$0xff]
        %v298 = vld [vmem:[%s225 + $0x90] sm:$0xff]
        %v299 = vld [vmem:[%s225 + $0x98] sm:$0xff]
        %v300 = vld [vmem:[%s225 + $0xa0] sm:$0xff]
        %v301 = vld [vmem:[%s225 + $0xa8] sm:$0xff]
        %v302 = vld [vmem:[%s225 + $0xb0] sm:$0xff]
        %v303 = vld [vmem:[%s225 + $0xb8] sm:$0xff]
        %v304 = vld [vmem:[%s225 + $0xc0] sm:$0xff]
        %v305 = vld [vmem:[%s225 + $0xc8] sm:$0xff]
        %v306 = vld [vmem:[%s225 + $0xd0] sm:$0xff]
        %v307 = vld [vmem:[%s225 + $0xd8] sm:$0xff]
        %v308 = vld [vmem:[%s225 + $0xe0] sm:$0xff]
        %v309 = vld [vmem:[%s225 + $0xe8] sm:$0xff]
        %v310 = vld [vmem:[%s225 + $0xf0] sm:$0xff]
        %v311 = vld [vmem:[%s225 + $0xf8] sm:$0xff]
        %v312 = vld [vmem:[%s225 + $0x100] sm:$0xff]
        %v313 = vld [vmem:[%s225 + $0x108] sm:$0xff]
        %v314 = vld [vmem:[%s225 + $0x110] sm:$0xff]
        %v315 = vld [vmem:[%s225 + $0x118] sm:$0xff]
        %v316 = vld [vmem:[%s225 + $0x120] sm:$0xff]
        %v317 = vld [vmem:[%s225 + $0x128] sm:$0xff]
        %v318 = vld [vmem:[%s225 + $0x130] sm:$0xff]
        %v319 = vld [vmem:[%s225 + $0x138] sm:$0xff]
        %v320 = vld [vmem:[%s225 + $0x140] sm:$0xff]
        %v321 = vld [vmem:[%s225 + $0x148] sm:$0xff]
        %v322 = vld [vmem:[%s225 + $0x150] sm:$0xff]
        %v323 = vld [vmem:[%s225 + $0x158] sm:$0xff]
        %v324 = vld [vmem:[%s225 + $0x160] sm:$0xff]
        %v325 = vld [vmem:[%s225 + $0x168] sm:$0xff]
        %v326 = vld [vmem:[%s225 + $0x170] sm:$0xff]
        %v327 = vld [vmem:[%s225 + $0x178] sm:$0xff]
        %v328 = vld [vmem:[%s225 + $0x180] sm:$0xff]
        %v329 = vld [vmem:[%s225 + $0x188] sm:$0xff]
        %v330 = vld [vmem:[%s225 + $0x190] sm:$0xff]
        %v331 = vld [vmem:[%s225 + $0x198] sm:$0xff]
        %v332 = vld [vmem:[%s225 + $0x1a0] sm:$0xff]
        %v333 = vld [vmem:[%s225 + $0x1a8] sm:$0xff]
        %v334 = vld [vmem:[%s225 + $0x1b0] sm:$0xff]
        %v335 = vld [vmem:[%s225 + $0x1b8] sm:$0xff]
        %v336 = vld [vmem:[%s225 + $0x1c0] sm:$0xff]
        %v337 = vld [vmem:[%s225 + $0x1c8] sm:$0xff]
        %v338 = vld [vmem:[%s225 + $0x1d0] sm:$0xff]
        %v339 = vld [vmem:[%s225 + $0x1d8] sm:$0xff]
        %v340 = vld [vmem:[%s225 + $0x1e0] sm:$0xff]
        %v341 = vld [vmem:[%s225 + $0x1e8] sm:$0xff]
        %v342 = vld [vmem:[%s225 + $0x1f0] sm:$0xff]
        %v343 = vld [vmem:[%s225 + $0x1f8] sm:$0xff]
        %v344 = vld [vmem:[%s225 + $0x200] sm:$0xff]
        %v345 = vld [vmem:[%s225 + $0x208] sm:$0xff]
        %v346 = vld [vmem:[%s225 + $0x210] sm:$0xff]
        %v347 = vld [vmem:[%s225 + $0x218] sm:$0xff]
        %v348 = vld [vmem:[%s225 + $0x220] sm:$0xff]
        %v349 = vld [vmem:[%s225 + $0x228] sm:$0xff]
        %v350 = vld [vmem:[%s225 + $0x230] sm:$0xff]
        %v351 = vld [vmem:[%s225 + $0x238] sm:$0xff]
        %v352 = vld [vmem:[%s225 + $0x240] sm:$0xff]
        %v353 = vld [vmem:[%s225 + $0x248] sm:$0xff]
        %v354 = vld [vmem:[%s225 + $0x250] sm:$0xff]
        %v355 = vld [vmem:[%s225 + $0x258] sm:$0xff]
        %v356 = vld [vmem:[%s225 + $0x260] sm:$0xff]
        %v357 = vld [vmem:[%s225 + $0x268] sm:$0xff]
        %v358 = vld [vmem:[%s225 + $0x270] sm:$0xff]
        %v359 = vld [vmem:[%s225 + $0x278] sm:$0xff]
        %v360 = vld [vmem:[%s234] sm:$0xff]
        %v361 = vld [vmem:[%s234 + $0x8] sm:$0xff]
        %v362 = vld [vmem:[%s234 + $0x10] sm:$0xff]
        %v363 = vld [vmem:[%s234 + $0x18] sm:$0xff]
        %v364 = vld [vmem:[%s234 + $0x20] sm:$0xff]
        %v370 = vlaneseq
        %v371 = vshrl.u32 %v370, 7
        %v372 = vsub.s32 0, %v371
        %v373 = vrot.slane %v360, %v372
        %v374 = vlaneseq
        %v375 = vshrl.u32 %v374, 7
        %v376 = vsub.s32 1, %v375
        %v377 = vrot.slane %v360, %v376
        %v378 = vlaneseq
        %v379 = vshrl.u32 %v378, 7
        %v380 = vsub.s32 2, %v379
        %v381 = vrot.slane %v360, %v380
        %v382 = vlaneseq
        %v383 = vshrl.u32 %v382, 7
        %v384 = vsub.s32 3, %v383
        %v385 = vrot.slane %v360, %v384
        %v386 = vlaneseq
        %v387 = vshrl.u32 %v386, 7
        %v388 = vsub.s32 4, %v387
        %v389 = vrot.slane %v360, %v388
        %v390 = vlaneseq
        %v391 = vshrl.u32 %v390, 7
        %v392 = vsub.s32 5, %v391
        %v393 = vrot.slane %v360, %v392
        %v394 = vlaneseq
        %v395 = vshrl.u32 %v394, 7
        %v396 = vsub.s32 6, %v395
        %v397 = vrot.slane %v360, %v396
        %v398 = vlaneseq
        %v399 = vshrl.u32 %v398, 7
        %v400 = vsub.s32 7, %v399
        %v401 = vrot.slane %v360, %v400
        %v402 = vlaneseq
        %v403 = vshrl.u32 %v402, 7
        %v404 = vsub.s32 0, %v403
        %v405 = vrot.slane %v361, %v404
        %v406 = vlaneseq
        %v407 = vshrl.u32 %v406, 7
        %v408 = vsub.s32 1, %v407
        %v409 = vrot.slane %v361, %v408
        %v410 = vlaneseq
        %v411 = vshrl.u32 %v410, 7
        %v412 = vsub.s32 2, %v411
        %v413 = vrot.slane %v361, %v412
        %v414 = vlaneseq
        %v415 = vshrl.u32 %v414, 7
        %v416 = vsub.s32 3, %v415
        %v417 = vrot.slane %v361, %v416
        %v418 = vlaneseq
        %v419 = vshrl.u32 %v418, 7
        %v420 = vsub.s32 4, %v419
        %v421 = vrot.slane %v361, %v420
        %v422 = vlaneseq
        %v423 = vshrl.u32 %v422, 7
        %v424 = vsub.s32 5, %v423
        %v425 = vrot.slane %v361, %v424
        %v426 = vlaneseq
        %v427 = vshrl.u32 %v426, 7
        %v428 = vsub.s32 6, %v427
        %v429 = vrot.slane %v361, %v428
        %v430 = vlaneseq
        %v431 = vshrl.u32 %v430, 7
        %v432 = vsub.s32 7, %v431
        %v433 = vrot.slane %v361, %v432
        %v434 = vlaneseq
        %v435 = vshrl.u32 %v434, 7
        %v436 = vsub.s32 0, %v435
        %v437 = vrot.slane %v362, %v436
        %v438 = vlaneseq
        %v439 = vshrl.u32 %v438, 7
        %v440 = vsub.s32 1, %v439
        %v441 = vrot.slane %v362, %v440
        %v442 = vlaneseq
        %v443 = vshrl.u32 %v442, 7
        %v444 = vsub.s32 2, %v443
        %v445 = vrot.slane %v362, %v444
        %v446 = vlaneseq
        %v447 = vshrl.u32 %v446, 7
        %v448 = vsub.s32 3, %v447
        %v449 = vrot.slane %v362, %v448
        %v450 = vlaneseq
        %v451 = vshrl.u32 %v450, 7
        %v452 = vsub.s32 4, %v451
        %v453 = vrot.slane %v362, %v452
        %v454 = vlaneseq
        %v455 = vshrl.u32 %v454, 7
        %v456 = vsub.s32 5, %v455
        %v457 = vrot.slane %v362, %v456
        %v458 = vlaneseq
        %v459 = vshrl.u32 %v458, 7
        %v460 = vsub.s32 6, %v459
        %v461 = vrot.slane %v362, %v460
        %v462 = vlaneseq
        %v463 = vshrl.u32 %v462, 7
        %v464 = vsub.s32 7, %v463
        %v465 = vrot.slane %v362, %v464
        %v466 = vlaneseq
        %v467 = vshrl.u32 %v466, 7
        %v468 = vsub.s32 0, %v467
        %v469 = vrot.slane %v363, %v468
        %v470 = vlaneseq
        %v471 = vshrl.u32 %v470, 7
        %v472 = vsub.s32 1, %v471
        %v473 = vrot.slane %v363, %v472
        %v474 = vlaneseq
        %v475 = vshrl.u32 %v474, 7
        %v476 = vsub.s32 2, %v475
        %v477 = vrot.slane %v363, %v476
        %v478 = vlaneseq
        %v479 = vshrl.u32 %v478, 7
        %v480 = vsub.s32 3, %v479
        %v481 = vrot.slane %v363, %v480
        %v482 = vlaneseq
        %v483 = vshrl.u32 %v482, 7
        %v484 = vsub.s32 4, %v483
        %v485 = vrot.slane %v363, %v484
        %v486 = vlaneseq
        %v487 = vshrl.u32 %v486, 7
        %v488 = vsub.s32 5, %v487
        %v489 = vrot.slane %v363, %v488
        %v490 = vlaneseq
        %v491 = vshrl.u32 %v490, 7
        %v492 = vsub.s32 6, %v491
        %v493 = vrot.slane %v363, %v492
        %v494 = vlaneseq
        %v495 = vshrl.u32 %v494, 7
        %v496 = vsub.s32 7, %v495
        %v497 = vrot.slane %v363, %v496
        %v498 = vlaneseq
        %v499 = vshrl.u32 %v498, 7
        %v500 = vsub.s32 0, %v499
        %v501 = vrot.slane %v364, %v500
        %v502 = vlaneseq
        %v503 = vshrl.u32 %v502, 7
        %v504 = vsub.s32 1, %v503
        %v505 = vrot.slane %v364, %v504
        %v506 = vlaneseq
        %v507 = vshrl.u32 %v506, 7
        %v508 = vsub.s32 2, %v507
        %v509 = vrot.slane %v364, %v508
        %v510 = vlaneseq
        %v511 = vshrl.u32 %v510, 7
        %v512 = vsub.s32 3, %v511
        %v513 = vrot.slane %v364, %v512
        %v514 = vlaneseq
        %v515 = vshrl.u32 %v514, 7
        %v516 = vsub.s32 4, %v515
        %v517 = vrot.slane %v364, %v516
        %v518 = vlaneseq
        %v519 = vshrl.u32 %v518, 7
        %v520 = vsub.s32 5, %v519
        %v521 = vrot.slane %v364, %v520
        %v522 = vlaneseq
        %v523 = vshrl.u32 %v522, 7
        %v524 = vsub.s32 6, %v523
        %v525 = vrot.slane %v364, %v524
        %v526 = vlaneseq
        %v527 = vshrl.u32 %v526, 7
        %v528 = vsub.s32 7, %v527
        %v529 = vrot.slane %v364, %v528
        %v650 = vunpack.c.l.b16 %v280
        %v651 = vunpack.c.h.b16 %v280
        %v652 = vunpack.c.l.b16 %v281
        %v653 = vunpack.c.h.b16 %v281
        %v654 = vunpack.c.l.b16 %v282
        %v655 = vunpack.c.h.b16 %v282
        %v656 = vunpack.c.l.b16 %v283
        %v657 = vunpack.c.h.b16 %v283
        %v658 = vunpack.c.l.b16 %v284
        %v659 = vunpack.c.h.b16 %v284
        %v660 = vunpack.c.l.b16 %v285
        %v661 = vunpack.c.h.b16 %v285
        %v662 = vunpack.c.l.b16 %v286
        %v663 = vunpack.c.h.b16 %v286
        %v664 = vunpack.c.l.b16 %v287
        %v665 = vunpack.c.h.b16 %v287
        %v666 = vunpack.c.l.b16 %v288
        %v667 = vunpack.c.h.b16 %v288
        %v668 = vunpack.c.l.b16 %v289
        %v669 = vunpack.c.h.b16 %v289
        %v670 = vunpack.c.l.b16 %v290
        %v671 = vunpack.c.h.b16 %v290
        %v672 = vunpack.c.l.b16 %v291
        %v673 = vunpack.c.h.b16 %v291
        %v674 = vunpack.c.l.b16 %v292
        %v675 = vunpack.c.h.b16 %v292
        %v676 = vunpack.c.l.b16 %v293
        %v677 = vunpack.c.h.b16 %v293
        %v678 = vunpack.c.l.b16 %v294
        %v679 = vunpack.c.h.b16 %v294
        %v680 = vunpack.c.l.b16 %v295
        %v681 = vunpack.c.h.b16 %v295
        %v682 = vunpack.c.l.b16 %v296
        %v683 = vunpack.c.h.b16 %v296
        %v684 = vunpack.c.l.b16 %v297
        %v685 = vunpack.c.h.b16 %v297
        %v686 = vunpack.c.l.b16 %v298
        %v687 = vunpack.c.h.b16 %v298
        %v688 = vunpack.c.l.b16 %v299
        %v689 = vunpack.c.h.b16 %v299
        %v690 = vunpack.c.l.b16 %v300
        %v691 = vunpack.c.h.b16 %v300
        %v692 = vunpack.c.l.b16 %v301
        %v693 = vunpack.c.h.b16 %v301
        %v694 = vunpack.c.l.b16 %v302
        %v695 = vunpack.c.h.b16 %v302
        %v696 = vunpack.c.l.b16 %v303
        %v697 = vunpack.c.h.b16 %v303
        %v698 = vunpack.c.l.b16 %v304
        %v699 = vunpack.c.h.b16 %v304
        %v700 = vunpack.c.l.b16 %v305
        %v701 = vunpack.c.h.b16 %v305
        %v702 = vunpack.c.l.b16 %v306
        %v703 = vunpack.c.h.b16 %v306
        %v704 = vunpack.c.l.b16 %v307
        %v705 = vunpack.c.h.b16 %v307
        %v706 = vunpack.c.l.b16 %v308
        %v707 = vunpack.c.h.b16 %v308
        %v708 = vunpack.c.l.b16 %v309
        %v709 = vunpack.c.h.b16 %v309
        %v710 = vunpack.c.l.b16 %v310
        %v711 = vunpack.c.h.b16 %v310
        %v712 = vunpack.c.l.b16 %v311
        %v713 = vunpack.c.h.b16 %v311
        %v714 = vunpack.c.l.b16 %v312
        %v715 = vunpack.c.h.b16 %v312
        %v716 = vunpack.c.l.b16 %v313
        %v717 = vunpack.c.h.b16 %v313
        %v718 = vunpack.c.l.b16 %v314
        %v719 = vunpack.c.h.b16 %v314
        %v720 = vunpack.c.l.b16 %v315
        %v721 = vunpack.c.h.b16 %v315
        %v722 = vunpack.c.l.b16 %v316
        %v723 = vunpack.c.h.b16 %v316
        %v724 = vunpack.c.l.b16 %v317
        %v725 = vunpack.c.h.b16 %v317
        %v726 = vunpack.c.l.b16 %v318
        %v727 = vunpack.c.h.b16 %v318
        %v728 = vunpack.c.l.b16 %v319
        %v729 = vunpack.c.h.b16 %v319
        %v730 = vunpack.c.l.b16 %v320
        %v731 = vunpack.c.h.b16 %v320
        %v732 = vunpack.c.l.b16 %v321
        %v733 = vunpack.c.h.b16 %v321
        %v734 = vunpack.c.l.b16 %v322
        %v735 = vunpack.c.h.b16 %v322
        %v736 = vunpack.c.l.b16 %v323
        %v737 = vunpack.c.h.b16 %v323
        %v738 = vunpack.c.l.b16 %v324
        %v739 = vunpack.c.h.b16 %v324
        %v740 = vunpack.c.l.b16 %v325
        %v741 = vunpack.c.h.b16 %v325
        %v742 = vunpack.c.l.b16 %v326
        %v743 = vunpack.c.h.b16 %v326
        %v744 = vunpack.c.l.b16 %v327
        %v745 = vunpack.c.h.b16 %v327
        %v746 = vunpack.c.l.b16 %v328
        %v747 = vunpack.c.h.b16 %v328
        %v748 = vunpack.c.l.b16 %v329
        %v749 = vunpack.c.h.b16 %v329
        %v750 = vunpack.c.l.b16 %v330
        %v751 = vunpack.c.h.b16 %v330
        %v752 = vunpack.c.l.b16 %v331
        %v753 = vunpack.c.h.b16 %v331
        %v754 = vunpack.c.l.b16 %v332
        %v755 = vunpack.c.h.b16 %v332
        %v756 = vunpack.c.l.b16 %v333
        %v757 = vunpack.c.h.b16 %v333
        %v758 = vunpack.c.l.b16 %v334
        %v759 = vunpack.c.h.b16 %v334
        %v760 = vunpack.c.l.b16 %v335
        %v761 = vunpack.c.h.b16 %v335
        %v762 = vunpack.c.l.b16 %v336
        %v763 = vunpack.c.h.b16 %v336
        %v764 = vunpack.c.l.b16 %v337
        %v765 = vunpack.c.h.b16 %v337
        %v766 = vunpack.c.l.b16 %v338
        %v767 = vunpack.c.h.b16 %v338
        %v768 = vunpack.c.l.b16 %v339
        %v769 = vunpack.c.h.b16 %v339
        %v770 = vunpack.c.l.b16 %v340
        %v771 = vunpack.c.h.b16 %v340
        %v772 = vunpack.c.l.b16 %v341
        %v773 = vunpack.c.h.b16 %v341
        %v774 = vunpack.c.l.b16 %v342
        %v775 = vunpack.c.h.b16 %v342
        %v776 = vunpack.c.l.b16 %v343
        %v777 = vunpack.c.h.b16 %v343
        %v778 = vunpack.c.l.b16 %v344
        %v779 = vunpack.c.h.b16 %v344
        %v780 = vunpack.c.l.b16 %v345
        %v781 = vunpack.c.h.b16 %v345
        %v782 = vunpack.c.l.b16 %v346
        %v783 = vunpack.c.h.b16 %v346
        %v784 = vunpack.c.l.b16 %v347
        %v785 = vunpack.c.h.b16 %v347
        %v786 = vunpack.c.l.b16 %v348
        %v787 = vunpack.c.h.b16 %v348
        %v788 = vunpack.c.l.b16 %v349
        %v789 = vunpack.c.h.b16 %v349
        %v790 = vunpack.c.l.b16 %v350
        %v791 = vunpack.c.h.b16 %v350
        %v792 = vunpack.c.l.b16 %v351
        %v793 = vunpack.c.h.b16 %v351
        %v794 = vunpack.c.l.b16 %v352
        %v795 = vunpack.c.h.b16 %v352
        %v796 = vunpack.c.l.b16 %v353
        %v797 = vunpack.c.h.b16 %v353
        %v798 = vunpack.c.l.b16 %v354
        %v799 = vunpack.c.h.b16 %v354
        %v800 = vunpack.c.l.b16 %v355
        %v801 = vunpack.c.h.b16 %v355
        %v802 = vunpack.c.l.b16 %v356
        %v803 = vunpack.c.h.b16 %v356
        %v804 = vunpack.c.l.b16 %v357
        %v805 = vunpack.c.h.b16 %v357
        %v806 = vunpack.c.l.b16 %v358
        %v807 = vunpack.c.h.b16 %v358
        %v808 = vunpack.c.l.b16 %v359
        %v809 = vunpack.c.h.b16 %v359
        %v810 = vpack.c.b16 %v690, %v650
        %v811 = vpack.c.b16 %v691, %v651
        %v812 = vpack.c.b16 %v692, %v652
        %v813 = vpack.c.b16 %v693, %v653
        %v814 = vpack.c.b16 %v694, %v654
        %v815 = vpack.c.b16 %v695, %v655
        %v816 = vpack.c.b16 %v696, %v656
        %v817 = vpack.c.b16 %v697, %v657
        %v818 = vpack.c.b16 %v698, %v658
        %v819 = vpack.c.b16 %v699, %v659
        %v820 = vpack.c.b16 %v700, %v660
        %v821 = vpack.c.b16 %v701, %v661
        %v822 = vpack.c.b16 %v702, %v662
        %v823 = vpack.c.b16 %v703, %v663
        %v824 = vpack.c.b16 %v704, %v664
        %v825 = vpack.c.b16 %v705, %v665
        %v826 = vpack.c.b16 %v706, %v666
        %v827 = vpack.c.b16 %v707, %v667
        %v828 = vpack.c.b16 %v708, %v668
        %v829 = vpack.c.b16 %v709, %v669
        %v830 = vpack.c.b16 %v710, %v670
        %v831 = vpack.c.b16 %v711, %v671
        %v832 = vpack.c.b16 %v712, %v672
        %v833 = vpack.c.b16 %v713, %v673
        %v834 = vpack.c.b16 %v714, %v674
        %v835 = vpack.c.b16 %v715, %v675
        %v836 = vpack.c.b16 %v716, %v676
        %v837 = vpack.c.b16 %v717, %v677
        %v838 = vpack.c.b16 %v718, %v678
        %v839 = vpack.c.b16 %v719, %v679
        %v840 = vpack.c.b16 %v720, %v680
        %v841 = vpack.c.b16 %v721, %v681
        %v842 = vpack.c.b16 %v722, %v682
        %v843 = vpack.c.b16 %v723, %v683
        %v844 = vpack.c.b16 %v724, %v684
        %v845 = vpack.c.b16 %v725, %v685
        %v846 = vpack.c.b16 %v726, %v686
        %v847 = vpack.c.b16 %v727, %v687
        %v848 = vpack.c.b16 %v728, %v688
        %v849 = vpack.c.b16 %v729, %v689
        %v850 = vpack.c.b16 %v770, %v730
        %v851 = vpack.c.b16 %v771, %v731
        %v852 = vpack.c.b16 %v772, %v732
        %v853 = vpack.c.b16 %v773, %v733
        %v854 = vpack.c.b16 %v774, %v734
        %v855 = vpack.c.b16 %v775, %v735
        %v856 = vpack.c.b16 %v776, %v736
        %v857 = vpack.c.b16 %v777, %v737
        %v858 = vpack.c.b16 %v778, %v738
        %v859 = vpack.c.b16 %v779, %v739
        %v860 = vpack.c.b16 %v780, %v740
        %v861 = vpack.c.b16 %v781, %v741
        %v862 = vpack.c.b16 %v782, %v742
        %v863 = vpack.c.b16 %v783, %v743
        %v864 = vpack.c.b16 %v784, %v744
        %v865 = vpack.c.b16 %v785, %v745
        %v866 = vpack.c.b16 %v786, %v746
        %v867 = vpack.c.b16 %v787, %v747
        %v868 = vpack.c.b16 %v788, %v748
        %v869 = vpack.c.b16 %v789, %v749
        %v870 = vpack.c.b16 %v790, %v750
        %v871 = vpack.c.b16 %v791, %v751
        %v872 = vpack.c.b16 %v792, %v752
        %v873 = vpack.c.b16 %v793, %v753
        %v874 = vpack.c.b16 %v794, %v754
        %v875 = vpack.c.b16 %v795, %v755
        %v876 = vpack.c.b16 %v796, %v756
        %v877 = vpack.c.b16 %v797, %v757
        %v878 = vpack.c.b16 %v798, %v758
        %v879 = vpack.c.b16 %v799, %v759
        %v880 = vpack.c.b16 %v800, %v760
        %v881 = vpack.c.b16 %v801, %v761
        %v882 = vpack.c.b16 %v802, %v762
        %v883 = vpack.c.b16 %v803, %v763
        %v884 = vpack.c.b16 %v804, %v764
        %v885 = vpack.c.b16 %v805, %v765
        %v886 = vpack.c.b16 %v806, %v766
        %v887 = vpack.c.b16 %v807, %v767
        %v888 = vpack.c.b16 %v808, %v768
        %v889 = vpack.c.b16 %v809, %v769
        %vm970 = vcmask 261120
        %v972 = vsel %vm970, %v279, 0
        %974 = vmatprep.subr.bf16.mxu0 0
        %975 = vmatpush1.bf16.msra.mxu0 0
        %976 = vmatprep.subr.bf16.mxu0 0
        %977 = vmatpush1.bf16.msra.mxu0 0
        %978 = vmatprep.subr.bf16.mxu0 0
        %979 = vmatpush1.bf16.msra.mxu0 0
        %980 = vmatprep.subr.bf16.mxu0 0
        %981 = vmatpush1.bf16.msra.mxu0 0
        %982 = vmatprep.subr.bf16.mxu0 0
        %983 = vmatpush1.bf16.msra.mxu0 0
        %984 = vmatprep.subr.bf16.mxu0 0
        %985 = vmatpush1.bf16.msra.mxu0 0
        %986 = vmatprep.subr.bf16.mxu0 %v851
        %987 = vmatpush1.bf16.msra.mxu0 %v850
        %988 = vmatprep.subr.bf16.mxu0 %v811
        %989 = vmatpush1.bf16.msra.mxu0 %v810
        %990 = vmatprep.subr.bf16.mxu0 0
        %991 = vmatpush2.bf16.msra.mxu0 0
        %992 = vmatprep.subr.bf16.mxu0 0
        %993 = vmatpush2.bf16.msra.mxu0 0
        %994 = vmatprep.subr.bf16.mxu0 0
        %995 = vmatpush2.bf16.msra.mxu0 0
        %996 = vmatprep.subr.bf16.mxu0 0
        %997 = vmatpush2.bf16.msra.mxu0 0
        %998 = vmatprep.subr.bf16.mxu0 0
        %999 = vmatpush2.bf16.msra.mxu0 0
        %1000 = vmatprep.subr.bf16.mxu0 0
        %1001 = vmatpush2.bf16.msra.mxu0 0
        %1002 = vmatprep.subr.bf16.mxu0 0
        %1003 = vmatpush2.bf16.msra.mxu0 0
        %1004 = vmatprep.subr.bf16.mxu0 0
        %1005 = vmatpush2.bf16.msra.mxu0 0
        %1006 = vmatprep.mubr.bf16.mxu0 0
        %1007 = vmatmul.mubr.bf16.gmra.mxu0 %v972
        %v1008 = vpop.f32.mrf.mxu0
        %v1009 = vadd.f32 %v373, %v1008
        %v1010 = vpop.f32.mrf.mxu0
        %v1011 = vadd.f32 %v377, %v1010
        %v1012 = vpop.f32.mrf.mxu0
        %v1013 = vpop.f32.mrf.mxu0
        %1014 = vdwg.mxu0
        %1015 = vmatprep.subr.bf16.mxu0 0
        %1016 = vmatpush1.bf16.msra.mxu0 0
        %1017 = vmatprep.subr.bf16.mxu0 0
        %1018 = vmatpush1.bf16.msra.mxu0 0
        %1019 = vmatprep.subr.bf16.mxu0 0
        %1020 = vmatpush1.bf16.msra.mxu0 0
        %1021 = vmatprep.subr.bf16.mxu0 0
        %1022 = vmatpush1.bf16.msra.mxu0 0
        %1023 = vmatprep.subr.bf16.mxu0 0
        %1024 = vmatpush1.bf16.msra.mxu0 0
        %1025 = vmatprep.subr.bf16.mxu0 0
        %1026 = vmatpush1.bf16.msra.mxu0 0
        %1027 = vmatprep.subr.bf16.mxu0 %v853
        %1028 = vmatpush1.bf16.msra.mxu0 %v852
        %1029 = vmatprep.subr.bf16.mxu0 %v813
        %1030 = vmatpush1.bf16.msra.mxu0 %v812
        %1031 = vmatprep.subr.bf16.mxu0 0
        %1032 = vmatpush2.bf16.msra.mxu0 0
        %1033 = vmatprep.subr.bf16.mxu0 0
        %1034 = vmatpush2.bf16.msra.mxu0 0
        %1035 = vmatprep.subr.bf16.mxu0 0
        %1036 = vmatpush2.bf16.msra.mxu0 0
        %1037 = vmatprep.subr.bf16.mxu0 0
        %1038 = vmatpush2.bf16.msra.mxu0 0
        %1039 = vmatprep.subr.bf16.mxu0 0
        %1040 = vmatpush2.bf16.msra.mxu0 0
        %1041 = vmatprep.subr.bf16.mxu0 0
        %1042 = vmatpush2.bf16.msra.mxu0 0
        %1043 = vmatprep.subr.bf16.mxu0 0
        %1044 = vmatpush2.bf16.msra.mxu0 0
        %1045 = vmatprep.subr.bf16.mxu0 0
        %1046 = vmatpush2.bf16.msra.mxu0 0
        %1047 = vmatprep.mubr.bf16.mxu0 0
        %1048 = vmatmul.mubr.bf16.gmra.mxu0 %v972
        %v1049 = vpop.f32.mrf.mxu0
        %v1050 = vadd.f32 %v381, %v1049
        %v1051 = vpop.f32.mrf.mxu0
        %v1052 = vadd.f32 %v385, %v1051
        %v1053 = vpop.f32.mrf.mxu0
        %v1054 = vpop.f32.mrf.mxu0
        %1055 = vdwg.mxu0
        %1056 = vmatprep.subr.bf16.mxu0 0
        %1057 = vmatpush1.bf16.msra.mxu0 0
        %1058 = vmatprep.subr.bf16.mxu0 0
        %1059 = vmatpush1.bf16.msra.mxu0 0
        %1060 = vmatprep.subr.bf16.mxu0 0
        %1061 = vmatpush1.bf16.msra.mxu0 0
        %1062 = vmatprep.subr.bf16.mxu0 0
        %1063 = vmatpush1.bf16.msra.mxu0 0
        %1064 = vmatprep.subr.bf16.mxu0 0
        %1065 = vmatpush1.bf16.msra.mxu0 0
        %1066 = vmatprep.subr.bf16.mxu0 0
        %1067 = vmatpush1.bf16.msra.mxu0 0
        %1068 = vmatprep.subr.bf16.mxu0 %v855
        %1069 = vmatpush1.bf16.msra.mxu0 %v854
        %1070 = vmatprep.subr.bf16.mxu0 %v815
        %1071 = vmatpush1.bf16.msra.mxu0 %v814
        %1072 = vmatprep.subr.bf16.mxu0 0
        %1073 = vmatpush2.bf16.msra.mxu0 0
        %1074 = vmatprep.subr.bf16.mxu0 0
        %1075 = vmatpush2.bf16.msra.mxu0 0
        %1076 = vmatprep.subr.bf16.mxu0 0
        %1077 = vmatpush2.bf16.msra.mxu0 0
        %1078 = vmatprep.subr.bf16.mxu0 0
        %1079 = vmatpush2.bf16.msra.mxu0 0
        %1080 = vmatprep.subr.bf16.mxu0 0
        %1081 = vmatpush2.bf16.msra.mxu0 0
        %1082 = vmatprep.subr.bf16.mxu0 0
        %1083 = vmatpush2.bf16.msra.mxu0 0
        %1084 = vmatprep.subr.bf16.mxu0 0
        %1085 = vmatpush2.bf16.msra.mxu0 0
        %1086 = vmatprep.subr.bf16.mxu0 0
        %1087 = vmatpush2.bf16.msra.mxu0 0
        %1088 = vmatprep.mubr.bf16.mxu0 0
        %1089 = vmatmul.mubr.bf16.gmra.mxu0 %v972
        %v1090 = vpop.f32.mrf.mxu0
        %v1091 = vadd.f32 %v389, %v1090
        %v1092 = vpop.f32.mrf.mxu0
        %v1093 = vadd.f32 %v393, %v1092
        %v1094 = vpop.f32.mrf.mxu0
        %v1095 = vpop.f32.mrf.mxu0
        %1096 = vdwg.mxu0
        %1097 = vmatprep.subr.bf16.mxu0 0
        %1098 = vmatpush1.bf16.msra.mxu0 0
        %1099 = vmatprep.subr.bf16.mxu0 0
        %1100 = vmatpush1.bf16.msra.mxu0 0
        %1101 = vmatprep.subr.bf16.mxu0 0
        %1102 = vmatpush1.bf16.msra.mxu0 0
        %1103 = vmatprep.subr.bf16.mxu0 0
        %1104 = vmatpush1.bf16.msra.mxu0 0
        %1105 = vmatprep.subr.bf16.mxu0 0
        %1106 = vmatpush1.bf16.msra.mxu0 0
        %1107 = vmatprep.subr.bf16.mxu0 0
        %1108 = vmatpush1.bf16.msra.mxu0 0
        %1109 = vmatprep.subr.bf16.mxu0 %v857
        %1110 = vmatpush1.bf16.msra.mxu0 %v856
        %1111 = vmatprep.subr.bf16.mxu0 %v817
        %1112 = vmatpush1.bf16.msra.mxu0 %v816
        %1113 = vmatprep.subr.bf16.mxu0 0
        %1114 = vmatpush2.bf16.msra.mxu0 0
        %1115 = vmatprep.subr.bf16.mxu0 0
        %1116 = vmatpush2.bf16.msra.mxu0 0
        %1117 = vmatprep.subr.bf16.mxu0 0
        %1118 = vmatpush2.bf16.msra.mxu0 0
        %1119 = vmatprep.subr.bf16.mxu0 0
        %1120 = vmatpush2.bf16.msra.mxu0 0
        %1121 = vmatprep.subr.bf16.mxu0 0
        %1122 = vmatpush2.bf16.msra.mxu0 0
        %1123 = vmatprep.subr.bf16.mxu0 0
        %1124 = vmatpush2.bf16.msra.mxu0 0
        %1125 = vmatprep.subr.bf16.mxu0 0
        %1126 = vmatpush2.bf16.msra.mxu0 0
        %1127 = vmatprep.subr.bf16.mxu0 0
        %1128 = vmatpush2.bf16.msra.mxu0 0
        %1129 = vmatprep.mubr.bf16.mxu0 0
        %1130 = vmatmul.mubr.bf16.gmra.mxu0 %v972
        %v1131 = vpop.f32.mrf.mxu0
        %v1132 = vadd.f32 %v397, %v1131
        %v1133 = vpop.f32.mrf.mxu0
        %v1134 = vadd.f32 %v401, %v1133
        %v1135 = vpop.f32.mrf.mxu0
        %v1136 = vpop.f32.mrf.mxu0
        %1137 = vdwg.mxu0
        %1138 = vmatprep.subr.bf16.mxu0 0
        %1139 = vmatpush1.bf16.msra.mxu0 0
        %1140 = vmatprep.subr.bf16.mxu0 0
        %1141 = vmatpush1.bf16.msra.mxu0 0
        %1142 = vmatprep.subr.bf16.mxu0 0
        %1143 = vmatpush1.bf16.msra.mxu0 0
        %1144 = vmatprep.subr.bf16.mxu0 0
        %1145 = vmatpush1.bf16.msra.mxu0 0
        %1146 = vmatprep.subr.bf16.mxu0 0
        %1147 = vmatpush1.bf16.msra.mxu0 0
        %1148 = vmatprep.subr.bf16.mxu0 0
        %1149 = vmatpush1.bf16.msra.mxu0 0
        %1150 = vmatprep.subr.bf16.mxu0 %v859
        %1151 = vmatpush1.bf16.msra.mxu0 %v858
        %1152 = vmatprep.subr.bf16.mxu0 %v819
        %1153 = vmatpush1.bf16.msra.mxu0 %v818
        %1154 = vmatprep.subr.bf16.mxu0 0
        %1155 = vmatpush2.bf16.msra.mxu0 0
        %1156 = vmatprep.subr.bf16.mxu0 0
        %1157 = vmatpush2.bf16.msra.mxu0 0
        %1158 = vmatprep.subr.bf16.mxu0 0
        %1159 = vmatpush2.bf16.msra.mxu0 0
        %1160 = vmatprep.subr.bf16.mxu0 0
        %1161 = vmatpush2.bf16.msra.mxu0 0
        %1162 = vmatprep.subr.bf16.mxu0 0
        %1163 = vmatpush2.bf16.msra.mxu0 0
        %1164 = vmatprep.subr.bf16.mxu0 0
        %1165 = vmatpush2.bf16.msra.mxu0 0
        %1166 = vmatprep.subr.bf16.mxu0 0
        %1167 = vmatpush2.bf16.msra.mxu0 0
        %1168 = vmatprep.subr.bf16.mxu0 0
        %1169 = vmatpush2.bf16.msra.mxu0 0
        %1170 = vmatprep.mubr.bf16.mxu0 0
        %1171 = vmatmul.mubr.bf16.gmra.mxu0 %v972
        %v1172 = vpop.f32.mrf.mxu0
        %v1173 = vadd.f32 %v405, %v1172
        %v1174 = vpop.f32.mrf.mxu0
        %v1175 = vadd.f32 %v409, %v1174
        %v1176 = vpop.f32.mrf.mxu0
        %v1177 = vpop.f32.mrf.mxu0
        %1178 = vdwg.mxu0
        %1179 = vmatprep.subr.bf16.mxu0 0
        %1180 = vmatpush1.bf16.msra.mxu0 0
        %1181 = vmatprep.subr.bf16.mxu0 0
        %1182 = vmatpush1.bf16.msra.mxu0 0
        %1183 = vmatprep.subr.bf16.mxu0 0
        %1184 = vmatpush1.bf16.msra.mxu0 0
        %1185 = vmatprep.subr.bf16.mxu0 0
        %1186 = vmatpush1.bf16.msra.mxu0 0
        %1187 = vmatprep.subr.bf16.mxu0 0
        %1188 = vmatpush1.bf16.msra.mxu0 0
        %1189 = vmatprep.subr.bf16.mxu0 0
        %1190 = vmatpush1.bf16.msra.mxu0 0
        %1191 = vmatprep.subr.bf16.mxu0 %v861
        %1192 = vmatpush1.bf16.msra.mxu0 %v860
        %1193 = vmatprep.subr.bf16.mxu0 %v821
        %1194 = vmatpush1.bf16.msra.mxu0 %v820
        %1195 = vmatprep.subr.bf16.mxu0 0
        %1196 = vmatpush2.bf16.msra.mxu0 0
        %1197 = vmatprep.subr.bf16.mxu0 0
        %1198 = vmatpush2.bf16.msra.mxu0 0
        %1199 = vmatprep.subr.bf16.mxu0 0
        %1200 = vmatpush2.bf16.msra.mxu0 0
        %1201 = vmatprep.subr.bf16.mxu0 0
        %1202 = vmatpush2.bf16.msra.mxu0 0
        %1203 = vmatprep.subr.bf16.mxu0 0
        %1204 = vmatpush2.bf16.msra.mxu0 0
        %1205 = vmatprep.subr.bf16.mxu0 0
        %1206 = vmatpush2.bf16.msra.mxu0 0
        %1207 = vmatprep.subr.bf16.mxu0 0
        %1208 = vmatpush2.bf16.msra.mxu0 0
        %1209 = vmatprep.subr.bf16.mxu0 0
        %1210 = vmatpush2.bf16.msra.mxu0 0
        %1211 = vmatprep.mubr.bf16.mxu0 0
        %1212 = vmatmul.mubr.bf16.gmra.mxu0 %v972
        %v1213 = vpop.f32.mrf.mxu0
        %v1214 = vadd.f32 %v413, %v1213
        %v1215 = vpop.f32.mrf.mxu0
        %v1216 = vadd.f32 %v417, %v1215
        %v1217 = vpop.f32.mrf.mxu0
        %v1218 = vpop.f32.mrf.mxu0
        %1219 = vdwg.mxu0
        %1220 = vmatprep.subr.bf16.mxu0 0
        %1221 = vmatpush1.bf16.msra.mxu0 0
        %1222 = vmatprep.subr.bf16.mxu0 0
        %1223 = vmatpush1.bf16.msra.mxu0 0
        %1224 = vmatprep.subr.bf16.mxu0 0
        %1225 = vmatpush1.bf16.msra.mxu0 0
        %1226 = vmatprep.subr.bf16.mxu0 0
        %1227 = vmatpush1.bf16.msra.mxu0 0
        %1228 = vmatprep.subr.bf16.mxu0 0
        %1229 = vmatpush1.bf16.msra.mxu0 0
        %1230 = vmatprep.subr.bf16.mxu0 0
        %1231 = vmatpush1.bf16.msra.mxu0 0
        %1232 = vmatprep.subr.bf16.mxu0 %v863
        %1233 = vmatpush1.bf16.msra.mxu0 %v862
        %1234 = vmatprep.subr.bf16.mxu0 %v823
        %1235 = vmatpush1.bf16.msra.mxu0 %v822
        %1236 = vmatprep.subr.bf16.mxu0 0
        %1237 = vmatpush2.bf16.msra.mxu0 0
        %1238 = vmatprep.subr.bf16.mxu0 0
        %1239 = vmatpush2.bf16.msra.mxu0 0
        %1240 = vmatprep.subr.bf16.mxu0 0
        %1241 = vmatpush2.bf16.msra.mxu0 0
        %1242 = vmatprep.subr.bf16.mxu0 0
        %1243 = vmatpush2.bf16.msra.mxu0 0
        %1244 = vmatprep.subr.bf16.mxu0 0
        %1245 = vmatpush2.bf16.msra.mxu0 0
        %1246 = vmatprep.subr.bf16.mxu0 0
        %1247 = vmatpush2.bf16.msra.mxu0 0
        %1248 = vmatprep.subr.bf16.mxu0 0
        %1249 = vmatpush2.bf16.msra.mxu0 0
        %1250 = vmatprep.subr.bf16.mxu0 0
        %1251 = vmatpush2.bf16.msra.mxu0 0
        %1252 = vmatprep.mubr.bf16.mxu0 0
        %1253 = vmatmul.mubr.bf16.gmra.mxu0 %v972
        %v1254 = vpop.f32.mrf.mxu0
        %v1255 = vadd.f32 %v421, %v1254
        %v1256 = vpop.f32.mrf.mxu0
        %v1257 = vadd.f32 %v425, %v1256
        %v1258 = vpop.f32.mrf.mxu0
        %v1259 = vpop.f32.mrf.mxu0
        %1260 = vdwg.mxu0
        %1261 = vmatprep.subr.bf16.mxu0 0
        %1262 = vmatpush1.bf16.msra.mxu0 0
        %1263 = vmatprep.subr.bf16.mxu0 0
        %1264 = vmatpush1.bf16.msra.mxu0 0
        %1265 = vmatprep.subr.bf16.mxu0 0
        %1266 = vmatpush1.bf16.msra.mxu0 0
        %1267 = vmatprep.subr.bf16.mxu0 0
        %1268 = vmatpush1.bf16.msra.mxu0 0
        %1269 = vmatprep.subr.bf16.mxu0 0
        %1270 = vmatpush1.bf16.msra.mxu0 0
        %1271 = vmatprep.subr.bf16.mxu0 0
        %1272 = vmatpush1.bf16.msra.mxu0 0
        %1273 = vmatprep.subr.bf16.mxu0 %v865
        %1274 = vmatpush1.bf16.msra.mxu0 %v864
        %1275 = vmatprep.subr.bf16.mxu0 %v825
        %1276 = vmatpush1.bf16.msra.mxu0 %v824
        %1277 = vmatprep.subr.bf16.mxu0 0
        %1278 = vmatpush2.bf16.msra.mxu0 0
        %1279 = vmatprep.subr.bf16.mxu0 0
        %1280 = vmatpush2.bf16.msra.mxu0 0
        %1281 = vmatprep.subr.bf16.mxu0 0
        %1282 = vmatpush2.bf16.msra.mxu0 0
        %1283 = vmatprep.subr.bf16.mxu0 0
        %1284 = vmatpush2.bf16.msra.mxu0 0
        %1285 = vmatprep.subr.bf16.mxu0 0
        %1286 = vmatpush2.bf16.msra.mxu0 0
        %1287 = vmatprep.subr.bf16.mxu0 0
        %1288 = vmatpush2.bf16.msra.mxu0 0
        %1289 = vmatprep.subr.bf16.mxu0 0
        %1290 = vmatpush2.bf16.msra.mxu0 0
        %1291 = vmatprep.subr.bf16.mxu0 0
        %1292 = vmatpush2.bf16.msra.mxu0 0
        %1293 = vmatprep.mubr.bf16.mxu0 0
        %1294 = vmatmul.mubr.bf16.gmra.mxu0 %v972
        %v1295 = vpop.f32.mrf.mxu0
        %v1296 = vadd.f32 %v429, %v1295
        %v1297 = vpop.f32.mrf.mxu0
        %v1298 = vadd.f32 %v433, %v1297
        %v1299 = vpop.f32.mrf.mxu0
        %v1300 = vpop.f32.mrf.mxu0
        %1301 = vdwg.mxu0
        %1302 = vmatprep.subr.bf16.mxu0 0
        %1303 = vmatpush1.bf16.msra.mxu0 0
        %1304 = vmatprep.subr.bf16.mxu0 0
        %1305 = vmatpush1.bf16.msra.mxu0 0
        %1306 = vmatprep.subr.bf16.mxu0 0
        %1307 = vmatpush1.bf16.msra.mxu0 0
        %1308 = vmatprep.subr.bf16.mxu0 0
        %1309 = vmatpush1.bf16.msra.mxu0 0
        %1310 = vmatprep.subr.bf16.mxu0 0
        %1311 = vmatpush1.bf16.msra.mxu0 0
        %1312 = vmatprep.subr.bf16.mxu0 0
        %1313 = vmatpush1.bf16.msra.mxu0 0
        %1314 = vmatprep.subr.bf16.mxu0 %v867
        %1315 = vmatpush1.bf16.msra.mxu0 %v866
        %1316 = vmatprep.subr.bf16.mxu0 %v827
        %1317 = vmatpush1.bf16.msra.mxu0 %v826
        %1318 = vmatprep.subr.bf16.mxu0 0
        %1319 = vmatpush2.bf16.msra.mxu0 0
        %1320 = vmatprep.subr.bf16.mxu0 0
        %1321 = vmatpush2.bf16.msra.mxu0 0
        %1322 = vmatprep.subr.bf16.mxu0 0
        %1323 = vmatpush2.bf16.msra.mxu0 0
        %1324 = vmatprep.subr.bf16.mxu0 0
        %1325 = vmatpush2.bf16.msra.mxu0 0
        %1326 = vmatprep.subr.bf16.mxu0 0
        %1327 = vmatpush2.bf16.msra.mxu0 0
        %1328 = vmatprep.subr.bf16.mxu0 0
        %1329 = vmatpush2.bf16.msra.mxu0 0
        %1330 = vmatprep.subr.bf16.mxu0 0
        %1331 = vmatpush2.bf16.msra.mxu0 0
        %1332 = vmatprep.subr.bf16.mxu0 0
        %1333 = vmatpush2.bf16.msra.mxu0 0
        %1334 = vmatprep.mubr.bf16.mxu0 0
        %1335 = vmatmul.mubr.bf16.gmra.mxu0 %v972
        %v1336 = vpop.f32.mrf.mxu0
        %v1337 = vadd.f32 %v437, %v1336
        %v1338 = vpop.f32.mrf.mxu0
        %v1339 = vadd.f32 %v441, %v1338
        %v1340 = vpop.f32.mrf.mxu0
        %v1341 = vpop.f32.mrf.mxu0
        %1342 = vdwg.mxu0
        %1343 = vmatprep.subr.bf16.mxu0 0
        %1344 = vmatpush1.bf16.msra.mxu0 0
        %1345 = vmatprep.subr.bf16.mxu0 0
        %1346 = vmatpush1.bf16.msra.mxu0 0
        %1347 = vmatprep.subr.bf16.mxu0 0
        %1348 = vmatpush1.bf16.msra.mxu0 0
        %1349 = vmatprep.subr.bf16.mxu0 0
        %1350 = vmatpush1.bf16.msra.mxu0 0
        %1351 = vmatprep.subr.bf16.mxu0 0
        %1352 = vmatpush1.bf16.msra.mxu0 0
        %1353 = vmatprep.subr.bf16.mxu0 0
        %1354 = vmatpush1.bf16.msra.mxu0 0
        %1355 = vmatprep.subr.bf16.mxu0 %v869
        %1356 = vmatpush1.bf16.msra.mxu0 %v868
        %1357 = vmatprep.subr.bf16.mxu0 %v829
        %1358 = vmatpush1.bf16.msra.mxu0 %v828
        %1359 = vmatprep.subr.bf16.mxu0 0
        %1360 = vmatpush2.bf16.msra.mxu0 0
        %1361 = vmatprep.subr.bf16.mxu0 0
        %1362 = vmatpush2.bf16.msra.mxu0 0
        %1363 = vmatprep.subr.bf16.mxu0 0
        %1364 = vmatpush2.bf16.msra.mxu0 0
        %1365 = vmatprep.subr.bf16.mxu0 0
        %1366 = vmatpush2.bf16.msra.mxu0 0
        %1367 = vmatprep.subr.bf16.mxu0 0
        %1368 = vmatpush2.bf16.msra.mxu0 0
        %1369 = vmatprep.subr.bf16.mxu0 0
        %1370 = vmatpush2.bf16.msra.mxu0 0
        %1371 = vmatprep.subr.bf16.mxu0 0
        %1372 = vmatpush2.bf16.msra.mxu0 0
        %1373 = vmatprep.subr.bf16.mxu0 0
        %1374 = vmatpush2.bf16.msra.mxu0 0
        %1375 = vmatprep.mubr.bf16.mxu0 0
        %1376 = vmatmul.mubr.bf16.gmra.mxu0 %v972
        %v1377 = vpop.f32.mrf.mxu0
        %v1378 = vadd.f32 %v445, %v1377
        %v1379 = vpop.f32.mrf.mxu0
        %v1380 = vadd.f32 %v449, %v1379
        %v1381 = vpop.f32.mrf.mxu0
        %v1382 = vpop.f32.mrf.mxu0
        %1383 = vdwg.mxu0
        %1384 = vmatprep.subr.bf16.mxu0 0
        %1385 = vmatpush1.bf16.msra.mxu0 0
        %1386 = vmatprep.subr.bf16.mxu0 0
        %1387 = vmatpush1.bf16.msra.mxu0 0
        %1388 = vmatprep.subr.bf16.mxu0 0
        %1389 = vmatpush1.bf16.msra.mxu0 0
        %1390 = vmatprep.subr.bf16.mxu0 0
        %1391 = vmatpush1.bf16.msra.mxu0 0
        %1392 = vmatprep.subr.bf16.mxu0 0
        %1393 = vmatpush1.bf16.msra.mxu0 0
        %1394 = vmatprep.subr.bf16.mxu0 0
        %1395 = vmatpush1.bf16.msra.mxu0 0
        %1396 = vmatprep.subr.bf16.mxu0 %v871
        %1397 = vmatpush1.bf16.msra.mxu0 %v870
        %1398 = vmatprep.subr.bf16.mxu0 %v831
        %1399 = vmatpush1.bf16.msra.mxu0 %v830
        %1400 = vmatprep.subr.bf16.mxu0 0
        %1401 = vmatpush2.bf16.msra.mxu0 0
        %1402 = vmatprep.subr.bf16.mxu0 0
        %1403 = vmatpush2.bf16.msra.mxu0 0
        %1404 = vmatprep.subr.bf16.mxu0 0
        %1405 = vmatpush2.bf16.msra.mxu0 0
        %1406 = vmatprep.subr.bf16.mxu0 0
        %1407 = vmatpush2.bf16.msra.mxu0 0
        %1408 = vmatprep.subr.bf16.mxu0 0
        %1409 = vmatpush2.bf16.msra.mxu0 0
        %1410 = vmatprep.subr.bf16.mxu0 0
        %1411 = vmatpush2.bf16.msra.mxu0 0
        %1412 = vmatprep.subr.bf16.mxu0 0
        %1413 = vmatpush2.bf16.msra.mxu0 0
        %1414 = vmatprep.subr.bf16.mxu0 0
        %1415 = vmatpush2.bf16.msra.mxu0 0
        %1416 = vmatprep.mubr.bf16.mxu0 0
        %1417 = vmatmul.mubr.bf16.gmra.mxu0 %v972
        %v1418 = vpop.f32.mrf.mxu0
        %v1419 = vadd.f32 %v453, %v1418
        %v1420 = vpop.f32.mrf.mxu0
        %v1421 = vadd.f32 %v457, %v1420
        %v1422 = vpop.f32.mrf.mxu0
        %v1423 = vpop.f32.mrf.mxu0
        %1424 = vdwg.mxu0
        %1425 = vmatprep.subr.bf16.mxu0 0
        %1426 = vmatpush1.bf16.msra.mxu0 0
        %1427 = vmatprep.subr.bf16.mxu0 0
        %1428 = vmatpush1.bf16.msra.mxu0 0
        %1429 = vmatprep.subr.bf16.mxu0 0
        %1430 = vmatpush1.bf16.msra.mxu0 0
        %1431 = vmatprep.subr.bf16.mxu0 0
        %1432 = vmatpush1.bf16.msra.mxu0 0
        %1433 = vmatprep.subr.bf16.mxu0 0
        %1434 = vmatpush1.bf16.msra.mxu0 0
        %1435 = vmatprep.subr.bf16.mxu0 0
        %1436 = vmatpush1.bf16.msra.mxu0 0
        %1437 = vmatprep.subr.bf16.mxu0 %v873
        %1438 = vmatpush1.bf16.msra.mxu0 %v872
        %1439 = vmatprep.subr.bf16.mxu0 %v833
        %1440 = vmatpush1.bf16.msra.mxu0 %v832
        %1441 = vmatprep.subr.bf16.mxu0 0
        %1442 = vmatpush2.bf16.msra.mxu0 0
        %1443 = vmatprep.subr.bf16.mxu0 0
        %1444 = vmatpush2.bf16.msra.mxu0 0
        %1445 = vmatprep.subr.bf16.mxu0 0
        %1446 = vmatpush2.bf16.msra.mxu0 0
        %1447 = vmatprep.subr.bf16.mxu0 0
        %1448 = vmatpush2.bf16.msra.mxu0 0
        %1449 = vmatprep.subr.bf16.mxu0 0
        %1450 = vmatpush2.bf16.msra.mxu0 0
        %1451 = vmatprep.subr.bf16.mxu0 0
        %1452 = vmatpush2.bf16.msra.mxu0 0
        %1453 = vmatprep.subr.bf16.mxu0 0
        %1454 = vmatpush2.bf16.msra.mxu0 0
        %1455 = vmatprep.subr.bf16.mxu0 0
        %1456 = vmatpush2.bf16.msra.mxu0 0
        %1457 = vmatprep.mubr.bf16.mxu0 0
        %1458 = vmatmul.mubr.bf16.gmra.mxu0 %v972
        %v1459 = vpop.f32.mrf.mxu0
        %v1460 = vadd.f32 %v461, %v1459
        %v1461 = vpop.f32.mrf.mxu0
        %v1462 = vadd.f32 %v465, %v1461
        %v1463 = vpop.f32.mrf.mxu0
        %v1464 = vpop.f32.mrf.mxu0
        %1465 = vdwg.mxu0
        %1466 = vmatprep.subr.bf16.mxu0 0
        %1467 = vmatpush1.bf16.msra.mxu0 0
        %1468 = vmatprep.subr.bf16.mxu0 0
        %1469 = vmatpush1.bf16.msra.mxu0 0
        %1470 = vmatprep.subr.bf16.mxu0 0
        %1471 = vmatpush1.bf16.msra.mxu0 0
        %1472 = vmatprep.subr.bf16.mxu0 0
        %1473 = vmatpush1.bf16.msra.mxu0 0
        %1474 = vmatprep.subr.bf16.mxu0 0
        %1475 = vmatpush1.bf16.msra.mxu0 0
        %1476 = vmatprep.subr.bf16.mxu0 0
        %1477 = vmatpush1.bf16.msra.mxu0 0
        %1478 = vmatprep.subr.bf16.mxu0 %v875
        %1479 = vmatpush1.bf16.msra.mxu0 %v874
        %1480 = vmatprep.subr.bf16.mxu0 %v835
        %1481 = vmatpush1.bf16.msra.mxu0 %v834
        %1482 = vmatprep.subr.bf16.mxu0 0
        %1483 = vmatpush2.bf16.msra.mxu0 0
        %1484 = vmatprep.subr.bf16.mxu0 0
        %1485 = vmatpush2.bf16.msra.mxu0 0
        %1486 = vmatprep.subr.bf16.mxu0 0
        %1487 = vmatpush2.bf16.msra.mxu0 0
        %1488 = vmatprep.subr.bf16.mxu0 0
        %1489 = vmatpush2.bf16.msra.mxu0 0
        %1490 = vmatprep.subr.bf16.mxu0 0
        %1491 = vmatpush2.bf16.msra.mxu0 0
        %1492 = vmatprep.subr.bf16.mxu0 0
        %1493 = vmatpush2.bf16.msra.mxu0 0
        %1494 = vmatprep.subr.bf16.mxu0 0
        %1495 = vmatpush2.bf16.msra.mxu0 0
        %1496 = vmatprep.subr.bf16.mxu0 0
        %1497 = vmatpush2.bf16.msra.mxu0 0
        %1498 = vmatprep.mubr.bf16.mxu0 0
        %1499 = vmatmul.mubr.bf16.gmra.mxu0 %v972
        %v1500 = vpop.f32.mrf.mxu0
        %v1501 = vadd.f32 %v469, %v1500
        %v1502 = vpop.f32.mrf.mxu0
        %v1503 = vadd.f32 %v473, %v1502
        %v1504 = vpop.f32.mrf.mxu0
        %v1505 = vpop.f32.mrf.mxu0
        %1506 = vdwg.mxu0
        %1507 = vmatprep.subr.bf16.mxu0 0
        %1508 = vmatpush1.bf16.msra.mxu0 0
        %1509 = vmatprep.subr.bf16.mxu0 0
        %1510 = vmatpush1.bf16.msra.mxu0 0
        %1511 = vmatprep.subr.bf16.mxu0 0
        %1512 = vmatpush1.bf16.msra.mxu0 0
        %1513 = vmatprep.subr.bf16.mxu0 0
        %1514 = vmatpush1.bf16.msra.mxu0 0
        %1515 = vmatprep.subr.bf16.mxu0 0
        %1516 = vmatpush1.bf16.msra.mxu0 0
        %1517 = vmatprep.subr.bf16.mxu0 0
        %1518 = vmatpush1.bf16.msra.mxu0 0
        %1519 = vmatprep.subr.bf16.mxu0 %v877
        %1520 = vmatpush1.bf16.msra.mxu0 %v876
        %1521 = vmatprep.subr.bf16.mxu0 %v837
        %1522 = vmatpush1.bf16.msra.mxu0 %v836
        %1523 = vmatprep.subr.bf16.mxu0 0
        %1524 = vmatpush2.bf16.msra.mxu0 0
        %1525 = vmatprep.subr.bf16.mxu0 0
        %1526 = vmatpush2.bf16.msra.mxu0 0
        %1527 = vmatprep.subr.bf16.mxu0 0
        %1528 = vmatpush2.bf16.msra.mxu0 0
        %1529 = vmatprep.subr.bf16.mxu0 0
        %1530 = vmatpush2.bf16.msra.mxu0 0
        %1531 = vmatprep.subr.bf16.mxu0 0
        %1532 = vmatpush2.bf16.msra.mxu0 0
        %1533 = vmatprep.subr.bf16.mxu0 0
        %1534 = vmatpush2.bf16.msra.mxu0 0
        %1535 = vmatprep.subr.bf16.mxu0 0
        %1536 = vmatpush2.bf16.msra.mxu0 0
        %1537 = vmatprep.subr.bf16.mxu0 0
        %1538 = vmatpush2.bf16.msra.mxu0 0
        %1539 = vmatprep.mubr.bf16.mxu0 0
        %1540 = vmatmul.mubr.bf16.gmra.mxu0 %v972
        %v1541 = vpop.f32.mrf.mxu0
        %v1542 = vadd.f32 %v477, %v1541
        %v1543 = vpop.f32.mrf.mxu0
        %v1544 = vadd.f32 %v481, %v1543
        %v1545 = vpop.f32.mrf.mxu0
        %v1546 = vpop.f32.mrf.mxu0
        %1547 = vdwg.mxu0
        %1548 = vmatprep.subr.bf16.mxu0 0
        %1549 = vmatpush1.bf16.msra.mxu0 0
        %1550 = vmatprep.subr.bf16.mxu0 0
        %1551 = vmatpush1.bf16.msra.mxu0 0
        %1552 = vmatprep.subr.bf16.mxu0 0
        %1553 = vmatpush1.bf16.msra.mxu0 0
        %1554 = vmatprep.subr.bf16.mxu0 0
        %1555 = vmatpush1.bf16.msra.mxu0 0
        %1556 = vmatprep.subr.bf16.mxu0 0
        %1557 = vmatpush1.bf16.msra.mxu0 0
        %1558 = vmatprep.subr.bf16.mxu0 0
        %1559 = vmatpush1.bf16.msra.mxu0 0
        %1560 = vmatprep.subr.bf16.mxu0 %v879
        %1561 = vmatpush1.bf16.msra.mxu0 %v878
        %1562 = vmatprep.subr.bf16.mxu0 %v839
        %1563 = vmatpush1.bf16.msra.mxu0 %v838
        %1564 = vmatprep.subr.bf16.mxu0 0
        %1565 = vmatpush2.bf16.msra.mxu0 0
        %1566 = vmatprep.subr.bf16.mxu0 0
        %1567 = vmatpush2.bf16.msra.mxu0 0
        %1568 = vmatprep.subr.bf16.mxu0 0
        %1569 = vmatpush2.bf16.msra.mxu0 0
        %1570 = vmatprep.subr.bf16.mxu0 0
        %1571 = vmatpush2.bf16.msra.mxu0 0
        %1572 = vmatprep.subr.bf16.mxu0 0
        %1573 = vmatpush2.bf16.msra.mxu0 0
        %1574 = vmatprep.subr.bf16.mxu0 0
        %1575 = vmatpush2.bf16.msra.mxu0 0
        %1576 = vmatprep.subr.bf16.mxu0 0
        %1577 = vmatpush2.bf16.msra.mxu0 0
        %1578 = vmatprep.subr.bf16.mxu0 0
        %1579 = vmatpush2.bf16.msra.mxu0 0
        %1580 = vmatprep.mubr.bf16.mxu0 0
        %1581 = vmatmul.mubr.bf16.gmra.mxu0 %v972
        %v1582 = vpop.f32.mrf.mxu0
        %v1583 = vadd.f32 %v485, %v1582
        %v1584 = vpop.f32.mrf.mxu0
        %v1585 = vadd.f32 %v489, %v1584
        %v1586 = vpop.f32.mrf.mxu0
        %v1587 = vpop.f32.mrf.mxu0
        %1588 = vdwg.mxu0
        %1589 = vmatprep.subr.bf16.mxu0 0
        %1590 = vmatpush1.bf16.msra.mxu0 0
        %1591 = vmatprep.subr.bf16.mxu0 0
        %1592 = vmatpush1.bf16.msra.mxu0 0
        %1593 = vmatprep.subr.bf16.mxu0 0
        %1594 = vmatpush1.bf16.msra.mxu0 0
        %1595 = vmatprep.subr.bf16.mxu0 0
        %1596 = vmatpush1.bf16.msra.mxu0 0
        %1597 = vmatprep.subr.bf16.mxu0 0
        %1598 = vmatpush1.bf16.msra.mxu0 0
        %1599 = vmatprep.subr.bf16.mxu0 0
        %1600 = vmatpush1.bf16.msra.mxu0 0
        %1601 = vmatprep.subr.bf16.mxu0 %v881
        %1602 = vmatpush1.bf16.msra.mxu0 %v880
        %1603 = vmatprep.subr.bf16.mxu0 %v841
        %1604 = vmatpush1.bf16.msra.mxu0 %v840
        %1605 = vmatprep.subr.bf16.mxu0 0
        %1606 = vmatpush2.bf16.msra.mxu0 0
        %1607 = vmatprep.subr.bf16.mxu0 0
        %1608 = vmatpush2.bf16.msra.mxu0 0
        %1609 = vmatprep.subr.bf16.mxu0 0
        %1610 = vmatpush2.bf16.msra.mxu0 0
        %1611 = vmatprep.subr.bf16.mxu0 0
        %1612 = vmatpush2.bf16.msra.mxu0 0
        %1613 = vmatprep.subr.bf16.mxu0 0
        %1614 = vmatpush2.bf16.msra.mxu0 0
        %1615 = vmatprep.subr.bf16.mxu0 0
        %1616 = vmatpush2.bf16.msra.mxu0 0
        %1617 = vmatprep.subr.bf16.mxu0 0
        %1618 = vmatpush2.bf16.msra.mxu0 0
        %1619 = vmatprep.subr.bf16.mxu0 0
        %1620 = vmatpush2.bf16.msra.mxu0 0
        %1621 = vmatprep.mubr.bf16.mxu0 0
        %1622 = vmatmul.mubr.bf16.gmra.mxu0 %v972
        %v1623 = vpop.f32.mrf.mxu0
        %v1624 = vadd.f32 %v493, %v1623
        %v1625 = vpop.f32.mrf.mxu0
        %v1626 = vadd.f32 %v497, %v1625
        %v1627 = vpop.f32.mrf.mxu0
        %v1628 = vpop.f32.mrf.mxu0
        %1629 = vdwg.mxu0
        %1630 = vmatprep.subr.bf16.mxu0 0
        %1631 = vmatpush1.bf16.msra.mxu0 0
        %1632 = vmatprep.subr.bf16.mxu0 0
        %1633 = vmatpush1.bf16.msra.mxu0 0
        %1634 = vmatprep.subr.bf16.mxu0 0
        %1635 = vmatpush1.bf16.msra.mxu0 0
        %1636 = vmatprep.subr.bf16.mxu0 0
        %1637 = vmatpush1.bf16.msra.mxu0 0
        %1638 = vmatprep.subr.bf16.mxu0 0
        %1639 = vmatpush1.bf16.msra.mxu0 0
        %1640 = vmatprep.subr.bf16.mxu0 0
        %1641 = vmatpush1.bf16.msra.mxu0 0
        %1642 = vmatprep.subr.bf16.mxu0 %v883
        %1643 = vmatpush1.bf16.msra.mxu0 %v882
        %1644 = vmatprep.subr.bf16.mxu0 %v843
        %1645 = vmatpush1.bf16.msra.mxu0 %v842
        %1646 = vmatprep.subr.bf16.mxu0 0
        %1647 = vmatpush2.bf16.msra.mxu0 0
        %1648 = vmatprep.subr.bf16.mxu0 0
        %1649 = vmatpush2.bf16.msra.mxu0 0
        %1650 = vmatprep.subr.bf16.mxu0 0
        %1651 = vmatpush2.bf16.msra.mxu0 0
        %1652 = vmatprep.subr.bf16.mxu0 0
        %1653 = vmatpush2.bf16.msra.mxu0 0
        %1654 = vmatprep.subr.bf16.mxu0 0
        %1655 = vmatpush2.bf16.msra.mxu0 0
        %1656 = vmatprep.subr.bf16.mxu0 0
        %1657 = vmatpush2.bf16.msra.mxu0 0
        %1658 = vmatprep.subr.bf16.mxu0 0
        %1659 = vmatpush2.bf16.msra.mxu0 0
        %1660 = vmatprep.subr.bf16.mxu0 0
        %1661 = vmatpush2.bf16.msra.mxu0 0
        %1662 = vmatprep.mubr.bf16.mxu0 0
        %1663 = vmatmul.mubr.bf16.gmra.mxu0 %v972
        %v1664 = vpop.f32.mrf.mxu0
        %v1665 = vadd.f32 %v501, %v1664
        %v1666 = vpop.f32.mrf.mxu0
        %v1667 = vadd.f32 %v505, %v1666
        %v1668 = vpop.f32.mrf.mxu0
        %v1669 = vpop.f32.mrf.mxu0
        %1670 = vdwg.mxu0
        %1671 = vmatprep.subr.bf16.mxu0 0
        %1672 = vmatpush1.bf16.msra.mxu0 0
        %1673 = vmatprep.subr.bf16.mxu0 0
        %1674 = vmatpush1.bf16.msra.mxu0 0
        %1675 = vmatprep.subr.bf16.mxu0 0
        %1676 = vmatpush1.bf16.msra.mxu0 0
        %1677 = vmatprep.subr.bf16.mxu0 0
        %1678 = vmatpush1.bf16.msra.mxu0 0
        %1679 = vmatprep.subr.bf16.mxu0 0
        %1680 = vmatpush1.bf16.msra.mxu0 0
        %1681 = vmatprep.subr.bf16.mxu0 0
        %1682 = vmatpush1.bf16.msra.mxu0 0
        %1683 = vmatprep.subr.bf16.mxu0 %v885
        %1684 = vmatpush1.bf16.msra.mxu0 %v884
        %1685 = vmatprep.subr.bf16.mxu0 %v845
        %1686 = vmatpush1.bf16.msra.mxu0 %v844
        %1687 = vmatprep.subr.bf16.mxu0 0
        %1688 = vmatpush2.bf16.msra.mxu0 0
        %1689 = vmatprep.subr.bf16.mxu0 0
        %1690 = vmatpush2.bf16.msra.mxu0 0
        %1691 = vmatprep.subr.bf16.mxu0 0
        %1692 = vmatpush2.bf16.msra.mxu0 0
        %1693 = vmatprep.subr.bf16.mxu0 0
        %1694 = vmatpush2.bf16.msra.mxu0 0
        %1695 = vmatprep.subr.bf16.mxu0 0
        %1696 = vmatpush2.bf16.msra.mxu0 0
        %1697 = vmatprep.subr.bf16.mxu0 0
        %1698 = vmatpush2.bf16.msra.mxu0 0
        %1699 = vmatprep.subr.bf16.mxu0 0
        %1700 = vmatpush2.bf16.msra.mxu0 0
        %1701 = vmatprep.subr.bf16.mxu0 0
        %1702 = vmatpush2.bf16.msra.mxu0 0
        %1703 = vmatprep.mubr.bf16.mxu0 0
        %1704 = vmatmul.mubr.bf16.gmra.mxu0 %v972
        %v1705 = vpop.f32.mrf.mxu0
        %v1706 = vadd.f32 %v509, %v1705
        %v1707 = vpop.f32.mrf.mxu0
        %v1708 = vadd.f32 %v513, %v1707
        %v1709 = vpop.f32.mrf.mxu0
        %v1710 = vpop.f32.mrf.mxu0
        %1711 = vdwg.mxu0
        %1712 = vmatprep.subr.bf16.mxu0 0
        %1713 = vmatpush1.bf16.msra.mxu0 0
        %1714 = vmatprep.subr.bf16.mxu0 0
        %1715 = vmatpush1.bf16.msra.mxu0 0
        %1716 = vmatprep.subr.bf16.mxu0 0
        %1717 = vmatpush1.bf16.msra.mxu0 0
        %1718 = vmatprep.subr.bf16.mxu0 0
        %1719 = vmatpush1.bf16.msra.mxu0 0
        %1720 = vmatprep.subr.bf16.mxu0 0
        %1721 = vmatpush1.bf16.msra.mxu0 0
        %1722 = vmatprep.subr.bf16.mxu0 0
        %1723 = vmatpush1.bf16.msra.mxu0 0
        %1724 = vmatprep.subr.bf16.mxu0 %v887
        %1725 = vmatpush1.bf16.msra.mxu0 %v886
        %1726 = vmatprep.subr.bf16.mxu0 %v847
        %1727 = vmatpush1.bf16.msra.mxu0 %v846
        %1728 = vmatprep.subr.bf16.mxu0 0
        %1729 = vmatpush2.bf16.msra.mxu0 0
        %1730 = vmatprep.subr.bf16.mxu0 0
        %1731 = vmatpush2.bf16.msra.mxu0 0
        %1732 = vmatprep.subr.bf16.mxu0 0
        %1733 = vmatpush2.bf16.msra.mxu0 0
        %1734 = vmatprep.subr.bf16.mxu0 0
        %1735 = vmatpush2.bf16.msra.mxu0 0
        %1736 = vmatprep.subr.bf16.mxu0 0
        %1737 = vmatpush2.bf16.msra.mxu0 0
        %1738 = vmatprep.subr.bf16.mxu0 0
        %1739 = vmatpush2.bf16.msra.mxu0 0
        %1740 = vmatprep.subr.bf16.mxu0 0
        %1741 = vmatpush2.bf16.msra.mxu0 0
        %1742 = vmatprep.subr.bf16.mxu0 0
        %1743 = vmatpush2.bf16.msra.mxu0 0
        %1744 = vmatprep.mubr.bf16.mxu0 0
        %1745 = vmatmul.mubr.bf16.gmra.mxu0 %v972
        %v1746 = vpop.f32.mrf.mxu0
        %v1747 = vadd.f32 %v517, %v1746
        %v1748 = vpop.f32.mrf.mxu0
        %v1749 = vadd.f32 %v521, %v1748
        %v1750 = vpop.f32.mrf.mxu0
        %v1751 = vpop.f32.mrf.mxu0
        %1752 = vdwg.mxu0
        %1753 = vmatprep.subr.bf16.mxu0 0
        %1754 = vmatpush1.bf16.msra.mxu0 0
        %1755 = vmatprep.subr.bf16.mxu0 0
        %1756 = vmatpush1.bf16.msra.mxu0 0
        %1757 = vmatprep.subr.bf16.mxu0 0
        %1758 = vmatpush1.bf16.msra.mxu0 0
        %1759 = vmatprep.subr.bf16.mxu0 0
        %1760 = vmatpush1.bf16.msra.mxu0 0
        %1761 = vmatprep.subr.bf16.mxu0 0
        %1762 = vmatpush1.bf16.msra.mxu0 0
        %1763 = vmatprep.subr.bf16.mxu0 0
        %1764 = vmatpush1.bf16.msra.mxu0 0
        %1765 = vmatprep.subr.bf16.mxu0 %v889
        %1766 = vmatpush1.bf16.msra.mxu0 %v888
        %1767 = vmatprep.subr.bf16.mxu0 %v849
        %1768 = vmatpush1.bf16.msra.mxu0 %v848
        %1769 = vmatprep.subr.bf16.mxu0 0
        %1770 = vmatpush2.bf16.msra.mxu0 0
        %1771 = vmatprep.subr.bf16.mxu0 0
        %1772 = vmatpush2.bf16.msra.mxu0 0
        %1773 = vmatprep.subr.bf16.mxu0 0
        %1774 = vmatpush2.bf16.msra.mxu0 0
        %1775 = vmatprep.subr.bf16.mxu0 0
        %1776 = vmatpush2.bf16.msra.mxu0 0
        %1777 = vmatprep.subr.bf16.mxu0 0
        %1778 = vmatpush2.bf16.msra.mxu0 0
        %1779 = vmatprep.subr.bf16.mxu0 0
        %1780 = vmatpush2.bf16.msra.mxu0 0
        %1781 = vmatprep.subr.bf16.mxu0 0
        %1782 = vmatpush2.bf16.msra.mxu0 0
        %1783 = vmatprep.subr.bf16.mxu0 0
        %1784 = vmatpush2.bf16.msra.mxu0 0
        %1785 = vmatprep.mubr.bf16.mxu0 0
        %1786 = vmatmul.mubr.bf16.gmra.mxu0 %v972
        %v1787 = vpop.f32.mrf.mxu0
        %v1788 = vadd.f32 %v525, %v1787
        %v1789 = vpop.f32.mrf.mxu0
        %v1790 = vadd.f32 %v529, %v1789
        %v1791 = vpop.f32.mrf.mxu0
        %v1792 = vpop.f32.mrf.mxu0
        %1793 = vdwg.mxu0
        %v1794 = vld [vmem:[%s273] sm:$0xff]
        %v1795 = vld [vmem:[%s273 + $0x8] sm:$0xff]
        %v1796 = vld [vmem:[%s273 + $0x10] sm:$0xff]
        %v1797 = vld [vmem:[%s273 + $0x18] sm:$0xff]
        %v1798 = vld [vmem:[%s273 + $0x20] sm:$0xff]
        %vm1799 = vnez %v1794
        %vm1800 = vnez %v1795
        %vm1801 = vnez %v1796
        %vm1802 = vnez %v1797
        %vm1803 = vnez %v1798
        %v1804 = vsel %vm1799, 16843009, 0
        %v1805 = vsel %vm1800, 16843009, 0
        %v1806 = vsel %vm1801, 16843009, 0
        %v1807 = vsel %vm1802, 16843009, 0
        %v1808 = vsel %vm1803, 16843009, 0
        %v1809 = vunpack.c.0.s8 %v1804
        %v1810 = vunpack.c.1.s8 %v1804
        %v1811 = vunpack.c.2.s8 %v1804
        %v1812 = vunpack.c.3.s8 %v1804
        %v1813 = vunpack.c.0.s8 %v1805
        %v1814 = vunpack.c.1.s8 %v1805
        %v1815 = vunpack.c.2.s8 %v1805
        %v1816 = vunpack.c.3.s8 %v1805
        %v1817 = vunpack.c.0.s8 %v1806
        %v1818 = vunpack.c.1.s8 %v1806
        %v1819 = vunpack.c.2.s8 %v1806
        %v1820 = vunpack.c.3.s8 %v1806
        %v1821 = vunpack.c.0.s8 %v1807
        %v1822 = vunpack.c.1.s8 %v1807
        %v1823 = vunpack.c.2.s8 %v1807
        %v1824 = vunpack.c.3.s8 %v1807
        %v1825 = vunpack.c.0.s8 %v1808
        %v1826 = vunpack.c.1.s8 %v1808
        %v1827 = vunpack.c.2.s8 %v1808
        %v1828 = vunpack.c.3.s8 %v1808
        %vm1829 = vcmp.ne.s32.totalorder %v1809, 0
        %vm1830 = vcmp.ne.s32.totalorder %v1810, 0
        %vm1831 = vcmp.ne.s32.totalorder %v1811, 0
        %vm1832 = vcmp.ne.s32.totalorder %v1812, 0
        %vm1833 = vcmp.ne.s32.totalorder %v1813, 0
        %vm1834 = vcmp.ne.s32.totalorder %v1814, 0
        %vm1835 = vcmp.ne.s32.totalorder %v1815, 0
        %vm1836 = vcmp.ne.s32.totalorder %v1816, 0
        %vm1837 = vcmp.ne.s32.totalorder %v1817, 0
        %vm1838 = vcmp.ne.s32.totalorder %v1818, 0
        %vm1839 = vcmp.ne.s32.totalorder %v1819, 0
        %vm1840 = vcmp.ne.s32.totalorder %v1820, 0
        %vm1841 = vcmp.ne.s32.totalorder %v1821, 0
        %vm1842 = vcmp.ne.s32.totalorder %v1822, 0
        %vm1843 = vcmp.ne.s32.totalorder %v1823, 0
        %vm1844 = vcmp.ne.s32.totalorder %v1824, 0
        %vm1845 = vcmp.ne.s32.totalorder %v1825, 0
        %vm1846 = vcmp.ne.s32.totalorder %v1826, 0
        %vm1847 = vcmp.ne.s32.totalorder %v1827, 0
        %vm1848 = vcmp.ne.s32.totalorder %v1828, 0
        %v1849 = vsel %vm1829, 1, 0
        %v1850 = vsel %vm1830, 1, 0
        %v1851 = vsel %vm1831, 1, 0
        %v1852 = vsel %vm1832, 1, 0
        %v1853 = vsel %vm1833, 1, 0
        %v1854 = vsel %vm1834, 1, 0
        %v1855 = vsel %vm1835, 1, 0
        %v1856 = vsel %vm1836, 1, 0
        %v1857 = vsel %vm1837, 1, 0
        %v1858 = vsel %vm1838, 1, 0
        %v1859 = vsel %vm1839, 1, 0
        %v1860 = vsel %vm1840, 1, 0
        %v1861 = vsel %vm1841, 1, 0
        %v1862 = vsel %vm1842, 1, 0
        %v1863 = vsel %vm1843, 1, 0
        %v1864 = vsel %vm1844, 1, 0
        %v1865 = vsel %vm1845, 1, 0
        %v1866 = vsel %vm1846, 1, 0
        %v1867 = vsel %vm1847, 1, 0
        %v1868 = vsel %vm1848, 1, 0
        %v1869 = vcombine.high %v1849, %v1849
        %v1870 = vcombine.high %v1850, %v1850
        %v1871 = vcombine.high %v1851, %v1851
        %v1872 = vcombine.high %v1852, %v1852
        %v1873 = vcombine.high %v1853, %v1853
        %v1874 = vcombine.high %v1854, %v1854
        %v1875 = vcombine.high %v1855, %v1855
        %v1876 = vcombine.high %v1856, %v1856
        %v1877 = vcombine.high %v1857, %v1857
        %v1878 = vcombine.high %v1858, %v1858
        %v1879 = vcombine.high %v1859, %v1859
        %v1880 = vcombine.high %v1860, %v1860
        %v1881 = vcombine.high %v1861, %v1861
        %v1882 = vcombine.high %v1862, %v1862
        %v1883 = vcombine.high %v1863, %v1863
        %v1884 = vcombine.high %v1864, %v1864
        %v1885 = vcombine.high %v1865, %v1865
        %v1886 = vcombine.high %v1866, %v1866
        %v1887 = vcombine.high %v1867, %v1867
        %v1888 = vcombine.high %v1868, %v1868
        %vm1889 = vcmp.ne.s32.totalorder %v1869, 0
        %vm1890 = vcmp.ne.s32.totalorder %v1870, 0
        %vm1891 = vcmp.ne.s32.totalorder %v1871, 0
        %vm1892 = vcmp.ne.s32.totalorder %v1872, 0
        %vm1893 = vcmp.ne.s32.totalorder %v1873, 0
        %vm1894 = vcmp.ne.s32.totalorder %v1874, 0
        %vm1895 = vcmp.ne.s32.totalorder %v1875, 0
        %vm1896 = vcmp.ne.s32.totalorder %v1876, 0
        %vm1897 = vcmp.ne.s32.totalorder %v1877, 0
        %vm1898 = vcmp.ne.s32.totalorder %v1878, 0
        %vm1899 = vcmp.ne.s32.totalorder %v1879, 0
        %vm1900 = vcmp.ne.s32.totalorder %v1880, 0
        %vm1901 = vcmp.ne.s32.totalorder %v1881, 0
        %vm1902 = vcmp.ne.s32.totalorder %v1882, 0
        %vm1903 = vcmp.ne.s32.totalorder %v1883, 0
        %vm1904 = vcmp.ne.s32.totalorder %v1884, 0
        %vm1905 = vcmp.ne.s32.totalorder %v1885, 0
        %vm1906 = vcmp.ne.s32.totalorder %v1886, 0
        %vm1907 = vcmp.ne.s32.totalorder %v1887, 0
        %vm1908 = vcmp.ne.s32.totalorder %v1888, 0
        %v1909 = vsel %vm1829, %v1009, -inf
        %v1910 = vsel %vm1889, %v1011, -inf
        %v1911 = vsel %vm1830, %v1050, -inf
        %v1912 = vsel %vm1890, %v1052, -inf
        %v1913 = vsel %vm1831, %v1091, -inf
        %v1914 = vsel %vm1891, %v1093, -inf
        %v1915 = vsel %vm1832, %v1132, -inf
        %v1916 = vsel %vm1892, %v1134, -inf
        %v1917 = vsel %vm1833, %v1173, -inf
        %v1918 = vsel %vm1893, %v1175, -inf
        %v1919 = vsel %vm1834, %v1214, -inf
        %v1920 = vsel %vm1894, %v1216, -inf
        %v1921 = vsel %vm1835, %v1255, -inf
        %v1922 = vsel %vm1895, %v1257, -inf
        %v1923 = vsel %vm1836, %v1296, -inf
        %v1924 = vsel %vm1896, %v1298, -inf
        %v1925 = vsel %vm1837, %v1337, -inf
        %v1926 = vsel %vm1897, %v1339, -inf
        %v1927 = vsel %vm1838, %v1378, -inf
        %v1928 = vsel %vm1898, %v1380, -inf
        %v1929 = vsel %vm1839, %v1419, -inf
        %v1930 = vsel %vm1899, %v1421, -inf
        %v1931 = vsel %vm1840, %v1460, -inf
        %v1932 = vsel %vm1900, %v1462, -inf
        %v1933 = vsel %vm1841, %v1501, -inf
        %v1934 = vsel %vm1901, %v1503, -inf
        %v1935 = vsel %vm1842, %v1542, -inf
        %v1936 = vsel %vm1902, %v1544, -inf
        %v1937 = vsel %vm1843, %v1583, -inf
        %v1938 = vsel %vm1903, %v1585, -inf
        %v1939 = vsel %vm1844, %v1624, -inf
        %v1940 = vsel %vm1904, %v1626, -inf
        %v1941 = vsel %vm1845, %v1665, -inf
        %v1942 = vsel %vm1905, %v1667, -inf
        %v1943 = vsel %vm1846, %v1706, -inf
        %v1944 = vsel %vm1906, %v1708, -inf
        %v1945 = vsel %vm1847, %v1747, -inf
        %v1946 = vsel %vm1907, %v1749, -inf
        %v1947 = vsel %vm1848, %v1788, -inf
        %v1948 = vsel %vm1908, %v1790, -inf
        %v1989 = vcombine.low %v1909, %v1910
        %v1990 = vcombine.low %v1911, %v1912
        %v1992 = vunpack.c.l.s4 1983009808
        %v1993 = vunpack.c.0.s8 %v1992
        %v1994 = vlaneseq
        %v1995 = vshrl.u32 %v1994, 7
        %v1996 = vsub.s32 %v1993, %v1995
        %v1997 = vrot.slane %v1989, %v1996
        %v1999 = vunpack.c.l.s4 1983009808
        %v2000 = vunpack.c.0.s8 %v1999
        %v2001 = vlaneseq
        %v2002 = vshrl.u32 %v2001, 7
        %v2003 = vsub.s32 %v2000, %v2002
        %v2004 = vrot.slane %v1990, %v2003
        %v2005 = vcombine.low %v1997, %v2004
        %v2006 = vcombine.low %v1913, %v1914
        %v2007 = vcombine.low %v1915, %v1916
        %v2009 = vunpack.c.l.s4 1983009808
        %v2010 = vunpack.c.0.s8 %v2009
        %v2011 = vlaneseq
        %v2012 = vshrl.u32 %v2011, 7
        %v2013 = vsub.s32 %v2010, %v2012
        %v2014 = vrot.slane %v2006, %v2013
        %v2016 = vunpack.c.l.s4 1983009808
        %v2017 = vunpack.c.0.s8 %v2016
        %v2018 = vlaneseq
        %v2019 = vshrl.u32 %v2018, 7
        %v2020 = vsub.s32 %v2017, %v2019
        %v2021 = vrot.slane %v2007, %v2020
        %v2022 = vcombine.low %v2014, %v2021
        %v2023 = vcombine.low %v1917, %v1918
        %v2024 = vcombine.low %v1919, %v1920
        %v2026 = vunpack.c.l.s4 1983009808
        %v2027 = vunpack.c.0.s8 %v2026
        %v2028 = vlaneseq
        %v2029 = vshrl.u32 %v2028, 7
        %v2030 = vsub.s32 %v2027, %v2029
        %v2031 = vrot.slane %v2023, %v2030
        %v2033 = vunpack.c.l.s4 1983009808
        %v2034 = vunpack.c.0.s8 %v2033
        %v2035 = vlaneseq
        %v2036 = vshrl.u32 %v2035, 7
        %v2037 = vsub.s32 %v2034, %v2036
        %v2038 = vrot.slane %v2024, %v2037
        %v2039 = vcombine.low %v2031, %v2038
        %v2040 = vcombine.low %v1921, %v1922
        %v2041 = vcombine.low %v1923, %v1924
        %v2043 = vunpack.c.l.s4 1983009808
        %v2044 = vunpack.c.0.s8 %v2043
        %v2045 = vlaneseq
        %v2046 = vshrl.u32 %v2045, 7
        %v2047 = vsub.s32 %v2044, %v2046
        %v2048 = vrot.slane %v2040, %v2047
        %v2050 = vunpack.c.l.s4 1983009808
        %v2051 = vunpack.c.0.s8 %v2050
        %v2052 = vlaneseq
        %v2053 = vshrl.u32 %v2052, 7
        %v2054 = vsub.s32 %v2051, %v2053
        %v2055 = vrot.slane %v2041, %v2054
        %v2056 = vcombine.low %v2048, %v2055
        %v2057 = vcombine.low %v1925, %v1926
        %v2058 = vcombine.low %v1927, %v1928
        %v2060 = vunpack.c.l.s4 1983009808
        %v2061 = vunpack.c.0.s8 %v2060
        %v2062 = vlaneseq
        %v2063 = vshrl.u32 %v2062, 7
        %v2064 = vsub.s32 %v2061, %v2063
        %v2065 = vrot.slane %v2057, %v2064
        %v2067 = vunpack.c.l.s4 1983009808
        %v2068 = vunpack.c.0.s8 %v2067
        %v2069 = vlaneseq
        %v2070 = vshrl.u32 %v2069, 7
        %v2071 = vsub.s32 %v2068, %v2070
        %v2072 = vrot.slane %v2058, %v2071
        %v2073 = vcombine.low %v2065, %v2072
        %v2074 = vcombine.low %v1929, %v1930
        %v2075 = vcombine.low %v1931, %v1932
        %v2077 = vunpack.c.l.s4 1983009808
        %v2078 = vunpack.c.0.s8 %v2077
        %v2079 = vlaneseq
        %v2080 = vshrl.u32 %v2079, 7
        %v2081 = vsub.s32 %v2078, %v2080
        %v2082 = vrot.slane %v2074, %v2081
        %v2084 = vunpack.c.l.s4 1983009808
        %v2085 = vunpack.c.0.s8 %v2084
        %v2086 = vlaneseq
        %v2087 = vshrl.u32 %v2086, 7
        %v2088 = vsub.s32 %v2085, %v2087
        %v2089 = vrot.slane %v2075, %v2088
        %v2090 = vcombine.low %v2082, %v2089
        %v2091 = vcombine.low %v1933, %v1934
        %v2092 = vcombine.low %v1935, %v1936
        %v2094 = vunpack.c.l.s4 1983009808
        %v2095 = vunpack.c.0.s8 %v2094
        %v2096 = vlaneseq
        %v2097 = vshrl.u32 %v2096, 7
        %v2098 = vsub.s32 %v2095, %v2097
        %v2099 = vrot.slane %v2091, %v2098
        %v2101 = vunpack.c.l.s4 1983009808
        %v2102 = vunpack.c.0.s8 %v2101
        %v2103 = vlaneseq
        %v2104 = vshrl.u32 %v2103, 7
        %v2105 = vsub.s32 %v2102, %v2104
        %v2106 = vrot.slane %v2092, %v2105
        %v2107 = vcombine.low %v2099, %v2106
        %v2108 = vcombine.low %v1937, %v1938
        %v2109 = vcombine.low %v1939, %v1940
        %v2111 = vunpack.c.l.s4 1983009808
        %v2112 = vunpack.c.0.s8 %v2111
        %v2113 = vlaneseq
        %v2114 = vshrl.u32 %v2113, 7
        %v2115 = vsub.s32 %v2112, %v2114
        %v2116 = vrot.slane %v2108, %v2115
        %v2118 = vunpack.c.l.s4 1983009808
        %v2119 = vunpack.c.0.s8 %v2118
        %v2120 = vlaneseq
        %v2121 = vshrl.u32 %v2120, 7
        %v2122 = vsub.s32 %v2119, %v2121
        %v2123 = vrot.slane %v2109, %v2122
        %v2124 = vcombine.low %v2116, %v2123
        %v2125 = vcombine.low %v1941, %v1942
        %v2126 = vcombine.low %v1943, %v1944
        %v2128 = vunpack.c.l.s4 1983009808
        %v2129 = vunpack.c.0.s8 %v2128
        %v2130 = vlaneseq
        %v2131 = vshrl.u32 %v2130, 7
        %v2132 = vsub.s32 %v2129, %v2131
        %v2133 = vrot.slane %v2125, %v2132
        %v2135 = vunpack.c.l.s4 1983009808
        %v2136 = vunpack.c.0.s8 %v2135
        %v2137 = vlaneseq
        %v2138 = vshrl.u32 %v2137, 7
        %v2139 = vsub.s32 %v2136, %v2138
        %v2140 = vrot.slane %v2126, %v2139
        %v2141 = vcombine.low %v2133, %v2140
        %v2142 = vcombine.low %v1945, %v1946
        %v2143 = vcombine.low %v1947, %v1948
        %v2145 = vunpack.c.l.s4 1983009808
        %v2146 = vunpack.c.0.s8 %v2145
        %v2147 = vlaneseq
        %v2148 = vshrl.u32 %v2147, 7
        %v2149 = vsub.s32 %v2146, %v2148
        %v2150 = vrot.slane %v2142, %v2149
        %v2152 = vunpack.c.l.s4 1983009808
        %v2153 = vunpack.c.0.s8 %v2152
        %v2154 = vlaneseq
        %v2155 = vshrl.u32 %v2154, 7
        %v2156 = vsub.s32 %v2153, %v2155
        %v2157 = vrot.slane %v2143, %v2156
        %v2158 = vcombine.low %v2150, %v2157
        %2169 = vst [vmem:[%s267] sm:$0xff] %v2005
        %2170 = vst [vmem:[%s267 + $0x8] sm:$0xff] %v2022
        %2171 = vst [vmem:[%s267 + $0x10] sm:$0xff] %v2039
        %2172 = vst [vmem:[%s267 + $0x18] sm:$0xff] %v2056
        %2173 = vst [vmem:[%s267 + $0x20] sm:$0xff] %v2073
        %2174 = vst [vmem:[%s267 + $0x28] sm:$0xff] %v2090
        %2175 = vst [vmem:[%s267 + $0x30] sm:$0xff] %v2107
        %2176 = vst [vmem:[%s267 + $0x38] sm:$0xff] %v2124
        %2177 = vst [vmem:[%s267 + $0x40] sm:$0xff] %v2141
        %2178 = vst [vmem:[%s267 + $0x48] sm:$0xff] %v2158
        %s2179 = sand.u32 %s131, 1
        %s2180 = scalar_lea.sflag [#allocation4], %s2179
        %s2181 = sand.u32 %s131, 1
        %s2182 = smul.addr %s2181, 80
        %s2183 = scalar_lea.vmem [#allocation7], %s2182
        // Predicated region
        $region45: #{policy_value_ponder_head.1} parent=35 // pred_check
          %p2184 = pneg %p141
        $region46: #{policy_value_ponder_head.1} parent=35 // pred_check_branch
          %2186 = sbr.rel (%p2184) target = $region48
        $region47: #{policy_value_ponder_head.1} parent=35 // pred_region
          %s2187 = smul.u32 40, %s24
          %s2189 = ssub.s32 1280, 1280
          %2190 = vsyncadd %s2180, %s2189
          %s2191 = smul.addr %s2187, 32
          %s2192 = scalar_lea.hbm %s4, %s2191
          %s2194 = sshll.u32 %s2183, 4
          %s2195 = int_to_ptr.vmem [resolvable:$true] %s2194
          %2197 = dma.vmem_to_hbm [thread:$0]  %s2195, 1280, %s2192, %s2180
        $region48: #{policy_value_ponder_head.1} parent=35 // pred_fallthru
          _
      $region36: #{policy_value_ponder_head.1} parent=5 // pred_fallthru
        _
      %p2198 = scmp.le.s32.totalorder 2, %s19
      // Predicated region
      $region49: #{policy_value_ponder_head.1} parent=5 // pred_check
        %p2199 = pneg %p2198
      $region50: #{policy_value_ponder_head.1} parent=5 // pred_check_branch
        %2201 = sbr.rel (%p2199) target = $region52
      $region51: #{policy_value_ponder_head.1} parent=5 // pred_region
        %s2202 = ssub.s32 %s19, 2
        // Predicated region
        $region53: #{policy_value_ponder_head.1} parent=51 // pred_check
          %p2203 = pneg %p147
        $region54: #{policy_value_ponder_head.1} parent=51 // pred_check_branch
          %2205 = sbr.rel (%p2203) target = $region56
        $region55: #{policy_value_ponder_head.1} parent=51 // pred_region
          %s2206 = sand.u32 %s132, 1
          %s2207 = scalar_lea.sflag [#allocation4], %s2206
          %s2208 = sand.u32 %s132, 1
          %s2209 = smul.addr %s2208, 80
          %s2210 = scalar_lea.vmem [#allocation7], %s2209
          %2211 = dma.done %s2207, 1280
        $region56: #{policy_value_ponder_head.1} parent=51 // pred_fallthru
          _
      $region52: #{policy_value_ponder_head.1} parent=5 // pred_fallthru
        _
    $region6: #{policy_value_ponder_head.1} parent=1 // loop_footer
      %s23 = sadd.s32 1, %s19
    $region7: #{policy_value_ponder_head.1} parent=1 // loop_footer_branch
      %18 = sbr.rel target = $region3
    $region8: #{policy_value_ponder_head.1} parent=1 // loop_exit
      _
    %2212 = vsyncpa [#allocation3], 1
    %s2213 = scalar_lea.sflag [#allocation3], 1
    %2214 = vsyncpa %s2213, 1
    %2215 = vsyncpa [#allocation6], 1
    %s2216 = scalar_lea.sflag [#allocation6], 1
    %2217 = vsyncpa %s2216, 1
    %2218 = vsyncpa [#allocation4], 1
    %s2219 = scalar_lea.sflag [#allocation4], 1
    %2220 = vsyncpa %s2219, 1

</llo_original>
